<compile_context>
chip_gen: v6e
topology: v6e:2x2x1
jax: 0.10.0
libtpu: 0.0.40
codegen_flags: <defaults>
</compile_context>

<pallas_src>
import functools
import math

import jax
import jax.numpy as jnp
from jax.experimental import pallas as pl
from jax.experimental.pallas import tpu as pltpu

EMBED = 512          # fc in_features is fixed to 512 in ArcFaceModel
NUM_CLASSES = 256    # small stand-in for num_classes=1000 (multiple of 128)


def _round_up(x, m):
    return -(-x // m) * m


def _choose_k_tiling(k_pad, tk_max):
    """Pick (tk, K_final): largest 128-multiple tile <= tk_max dividing k_pad
    (avoids DMA-ing an all-zero weight tail); only re-round K if no reasonable
    divisor exists."""
    if k_pad <= tk_max:
        return k_pad, k_pad
    best = 128
    for t in range(tk_max - tk_max % 128, 127, -128):
        if k_pad % t == 0:
            best = t
            break
    if best >= 1024:
        return best, k_pad
    return tk_max, _round_up(k_pad, tk_max)


def _arcface_fused_kernel(x_ref, wb_ref, wfct_ref, o_ref, acc_ref, *, tk):
    """Fused: K-tiled backbone projection -> F.normalize(emb) -> emb_n @ W_n^T.

    grid = (n_batch_tiles, n_k). The activation tile (tb, K_pad) and the head
    weight (512, N_pad) are resident across the K ("arbitrary") axis; only the
    backbone-weight tile streams per K step. acc_ref is a (tb, 512) f32 VMEM
    accumulator; o_ref is written once at the last K step.
    """
    k = pl.program_id(1)

    @pl.when(k == 0)
    def _():
        acc_ref[...] = jnp.zeros_like(acc_ref)

    # bf16 operands, f32 accumulation on the MXU. Activation is resident at
    # full K; slice the current K tile (128-aligned start) in-kernel.
    start = pl.multiple_of(k * tk, 128)
    acc_ref[...] += jnp.dot(
        x_ref[:, pl.ds(start, tk)], wb_ref[...],
        preferred_element_type=jnp.float32,
    )

    @pl.when(k == pl.num_programs(1) - 1)
    def _():
        # F.normalize(emb) in f32: sum-of-squares (XLU) + rsqrt (EUP), no divide.
        # Padded all-zero batch rows hit inv_norm = 1/eps but emb == 0, so the
        # product stays 0 (no NaN/Inf); eps**2 = 1e-24 is still a normal f32.
        eps = 1e-12
        emb = acc_ref[...]                                       # (tb, 512) f32
        sumsq = jnp.sum(emb * emb, axis=-1, keepdims=True)
        inv_norm = jax.lax.rsqrt(jnp.maximum(sumsq, eps * eps))
        xn = (emb * inv_norm).astype(wfct_ref.dtype)             # bf16 for MXU
        # Head weight pre-normalized + transposed: plain (tb,512)@(512,N_pad),
        # lane-dense output.
        o_ref[...] = jnp.dot(xn, wfct_ref[...], preferred_element_type=jnp.float32)


def make_arcface_forward(w_backbone, w_fc, *, tk_max=4096, tb=16):
    """One-time weight preparation + jitted per-call forward.

    w_backbone: (F_in, 512) stand-in backbone projection; w_fc: (num_classes, 512).
    Returns forward(x) with x: (B, C, H, W) NCHW.
    """
    f_in, embed = w_backbone.shape
    assert embed == EMBED
    n = w_fc.shape[0]

    n_pad = _round_up(n, 128)                           # lane-dense head output
    tk, k_pad = _choose_k_tiling(_round_up(f_in, 128), tk_max)
    n_k = k_pad // tk

    # ---- hoisted, batch-independent weight prep (done once) ------------------
    # Backbone weight: zero-pad K, cast to bf16 (native MXU operand).
    wb_p = jnp.zeros((k_pad, EMBED), jnp.bfloat16).at[:f_in, :].set(
        w_backbone.astype(jnp.bfloat16))

    # Head weight: F.normalize rows once in f32, zero-pad extra class columns
    # (zero logits, sliced away), transpose to (512, N_pad).
    eps = 1e-12
    wn = w_fc.astype(jnp.float32)
    wn = wn / jnp.maximum(jnp.linalg.norm(wn, axis=-1, keepdims=True), eps)
    wfct_p = jnp.zeros((EMBED, n_pad), jnp.bfloat16).at[:, :n].set(
        wn.T.astype(jnp.bfloat16))

    kernel = functools.partial(_arcface_fused_kernel, tk=tk)

    def forward(x):
        b = x.shape[0]
        feat = x.reshape(b, -1)                         # flatten NCHW (glue)
        assert feat.shape[1] == f_in, "input does not match prepared weights"
        b_pad = _round_up(max(b, tb), tb)               # bf16 packs 16 sublanes/vreg
        n_b = b_pad // tb

        feat_p = jnp.zeros((b_pad, k_pad), jnp.bfloat16).at[:b, :f_in].set(
            feat.astype(jnp.bfloat16))

        logits_p = pl.pallas_call(
            kernel,
            out_shape=jax.ShapeDtypeStruct((b_pad, n_pad), jnp.float32),
            grid_spec=pltpu.PrefetchScalarGridSpec(
                num_scalar_prefetch=0,
                grid=(n_b, n_k),
                in_specs=[
                    # Activation: full-K resident per batch tile (one DMA per
                    # batch tile, no per-K-step descriptor traffic).
                    pl.BlockSpec((tb, k_pad), lambda b_, k_: (b_, 0)),
                    # Backbone weight: the only per-K-step stream.
                    pl.BlockSpec((tk, EMBED), lambda b_, k_: (k_, 0)),
                    # Head weight: grid-invariant, DMA'd once.
                    pl.BlockSpec((EMBED, n_pad), lambda b_, k_: (0, 0)),
                ],
                out_specs=pl.BlockSpec((tb, n_pad), lambda b_, k_: (b_, 0)),
                scratch_shapes=[pltpu.VMEM((tb, EMBED), jnp.float32)],
            ),
            compiler_params=pltpu.CompilerParams(
                # Batch tiles independent (v7x: both TCs participate); K is the
                # reduction axis.
                dimension_semantics=("parallel", "arbitrary"),
                vmem_limit_bytes=32 * 1024 * 1024,
            ),
        )(feat_p, wb_p, wfct_p)

        return logits_p[:b, :n]

    return jax.jit(forward)


def _xavier_uniform(key, shape):
    """nn.init.xavier_uniform_ for a (fan_out, fan_in) weight."""
    fan_out, fan_in = shape
    bound = math.sqrt(6.0 / (fan_in + fan_out))
    return jax.random.uniform(key, shape, jnp.float32, -bound, bound)


def _reference(x, w_backbone, w_fc):
    """Pure-JAX f32 reference for correctness sanity check."""
    b = x.shape[0]
    feat = x.reshape(b, -1).astype(jnp.float32)
    emb = feat @ w_backbone
    eps = 1e-12
    xn = emb / jnp.maximum(jnp.linalg.norm(emb, axis=-1, keepdims=True), eps)
    wn = w_fc / jnp.maximum(jnp.linalg.norm(w_fc, axis=-1, keepdims=True), eps)
    return xn @ wn.T


if __name__ == "__main__":
    key = jax.random.PRNGKey(0)
    k_x, k_wb, k_wfc = jax.random.split(key, 3)

    # Small NCHW input consistent with an image-classification forward.
    B, C, H, W = 2, 4, 16, 16
    x = jax.random.normal(k_x, (B, C, H, W), dtype=jnp.float32)

    F_in = C * H * W
    # TODO(synk): the real IR_SE_50 / other backbone definitions are not part of
    # the reference snippet; a single linear projection to 512-d stands in.
    w_backbone = _xavier_uniform(k_wb, (EMBED, F_in)).T     # (F_in, 512)
    w_fc = _xavier_uniform(k_wfc, (NUM_CLASSES, EMBED))     # (out, in) nn.Parameter

    forward = make_arcface_forward(w_backbone, w_fc)        # weight prep hoisted
    out = jax.block_until_ready(forward(x))
    ref = _reference(x, w_backbone, w_fc)

    assert out.shape == (B, NUM_CLASSES)
    # bf16 matmul operands with f32 accumulation: cosine logits match the f32
    # reference to ~1e-3; use a 1e-2 tolerance.
    assert jnp.allclose(out, ref, atol=1e-2, rtol=1e-2), "mismatch vs JAX reference"

    print("KERNEL_OK")
</pallas_src>

<mosaic_0001>
module attributes {stable_mosaic.version = 11 : i64} {
  func.func @_arcface_fused_kernel(%arg0: i32, %arg1: i32, %arg2: memref<16x1024xbf16, #tpu.memory_space<vmem>>, %arg3: memref<1024x512xbf16, #tpu.memory_space<vmem>>, %arg4: memref<512x256xbf16, #tpu.memory_space<vmem>>, %arg5: memref<16x256xf32, #tpu.memory_space<vmem>>, %arg6: memref<16x512xf32, #tpu.memory_space<vmem>>) attributes {dimension_semantics = [#tpu.dimension_semantics<parallel>, #tpu.dimension_semantics<arbitrary>], iteration_bounds = array<i64: 1, 1>, scalar_prefetch = 0 : i64, scratch_operands = 1 : i64, tpu.core_type = #tpu.core_type<tc>, window_params = [{transform_indices = @transform_0, window_bounds = array<i64: 16, 1024>}, {transform_indices = @transform_1, window_bounds = array<i64: 1024, 512>}, {pipeline_mode = #tpu.pipeline_mode<synchronous>, transform_indices = @transform_2, window_bounds = array<i64: 512, 256>}, {transform_indices = @transform_3, window_bounds = array<i64: 16, 256>}]} {
    %c0_i32 = arith.constant 0 : i32
    %0 = arith.cmpi eq, %arg1, %c0_i32 : i32
    %1 = arith.extui %0 : i1 to i32
    %c0_i32_0 = arith.constant 0 : i32
    %2 = arith.cmpi ne, %1, %c0_i32_0 : i32
    scf.if %2 {
      %cst_9 = arith.constant 0.000000e+00 : f32
      %15 = vector.broadcast %cst_9 : f32 to vector<16x512xf32>
      %c0_10 = arith.constant 0 : index
      %c0_11 = arith.constant 0 : index
      %16 = vector.load %arg6[%c0_10, %c0_11] : memref<16x512xf32, #tpu.memory_space<vmem>>, vector<16x512xf32>
      tpu.vector_store %arg6[%c0_10, %c0_11], %15 {strides = array<i32>} : memref<16x512xf32, #tpu.memory_space<vmem>>, vector<16x512xf32>,
    } else {
    }
    %c1024_i32 = arith.constant 1024 : i32
    %3 = arith.muli %arg1, %c1024_i32 : i32
    %4 = tpu.assume_multiple %3, 128 : i32
    %c0 = arith.constant 0 : index
    %c0_1 = arith.constant 0 : index
    %5 = vector.load %arg6[%c0, %c0_1] : memref<16x512xf32, #tpu.memory_space<vmem>>, vector<16x512xf32>
    %c0_2 = arith.constant 0 : index
    %6 = arith.index_cast %4 : i32 to index
    %7 = vector.load %arg2[%c0_2, %6] : memref<16x1024xbf16, #tpu.memory_space<vmem>>, vector<16x1024xbf16>
    %c0_3 = arith.constant 0 : index
    %c0_4 = arith.constant 0 : index
    %8 = vector.load %arg3[%c0_3, %c0_4] : memref<1024x512xbf16, #tpu.memory_space<vmem>>, vector<1024x512xbf16>
    %cst = arith.constant dense<0.000000e+00> : vector<16x512xf32>
    %9 = tpu.matmul %7, %8, %cst {dimension_numbers = #tpu.dot_dimension_numbers<[1], [0], [0], [1], [0, 0, 1, 1], [], []>} : vector<16x1024xbf16>, vector<1024x512xbf16>, vector<16x512xf32> -> vector<16x512xf32>
    %10 = arith.addf %5, %9 : vector<16x512xf32>
    %c0_5 = arith.constant 0 : index
    %c0_6 = arith.constant 0 : index
    %11 = vector.load %arg6[%c0_5, %c0_6] : memref<16x512xf32, #tpu.memory_space<vmem>>, vector<16x512xf32>
    tpu.vector_store %arg6[%c0_5, %c0_6], %10 {strides = array<i32>} : memref<16x512xf32, #tpu.memory_space<vmem>>, vector<16x512xf32>,
    %c0_i32_7 = arith.constant 0 : i32
    %12 = arith.cmpi eq, %arg1, %c0_i32_7 : i32
    %13 = arith.extui %12 : i1 to i32
    %c0_i32_8 = arith.constant 0 : i32
    %14 = arith.cmpi ne, %13, %c0_i32_8 : i32
    scf.if %14 {
      %c0_9 = arith.constant 0 : index
      %c0_10 = arith.constant 0 : index
      %15 = vector.load %arg6[%c0_9, %c0_10] : memref<16x512xf32, #tpu.memory_space<vmem>>, vector<16x512xf32>
      %16 = arith.mulf %15, %15 : vector<16x512xf32>
      %cst_11 = arith.constant dense<0.000000e+00> : vector<16xf32>
      %17 = vector.multi_reduction <add>, %16, %cst_11 [1] : vector<16x512xf32> to vector<16xf32>
      %18 = vector.shape_cast %17 : vector<16xf32> to vector<16x1xf32>
      %cst_12 = arith.constant 1.000000e-24 : f32
      %19 = vector.broadcast %cst_12 : f32 to vector<16x1xf32>
      %20 = arith.maximumf %18, %19 : vector<16x1xf32>
      %21 = math.rsqrt %20 : vector<16x1xf32>
      %22 = vector.broadcast %21 : vector<16x1xf32> to vector<16x512xf32>
      %23 = arith.mulf %15, %22 : vector<16x512xf32>
      %24 = arith.truncf %23 : vector<16x512xf32> to vector<16x512xbf16>
      %c0_13 = arith.constant 0 : index
      %c0_14 = arith.constant 0 : index
      %25 = vector.load %arg4[%c0_13, %c0_14] : memref<512x256xbf16, #tpu.memory_space<vmem>>, vector<512x256xbf16>
      %cst_15 = arith.constant dense<0.000000e+00> : vector<16x256xf32>
      %26 = tpu.matmul %24, %25, %cst_15 {dimension_numbers = #tpu.dot_dimension_numbers<[1], [0], [0], [1], [0, 0, 1, 1], [], []>} : vector<16x512xbf16>, vector<512x256xbf16>, vector<16x256xf32> -> vector<16x256xf32>
      %c0_16 = arith.constant 0 : index
      %c0_17 = arith.constant 0 : index
      %27 = vector.load %arg5[%c0_16, %c0_17] : memref<16x256xf32, #tpu.memory_space<vmem>>, vector<16x256xf32>
      tpu.vector_store %arg5[%c0_16, %c0_17], %26 {strides = array<i32>} : memref<16x256xf32, #tpu.memory_space<vmem>>, vector<16x256xf32>,
    } else {
    }
    return
  }
  func.func @transform_0(%arg0: i32, %arg1: i32) -> (i32, i32) {
    %c0_i32 = arith.constant 0 : i32
    %c0_i32_0 = arith.constant 0 : i32
    return %arg0, %c0_i32 : i32, i32
  }
  func.func @transform_1(%arg0: i32, %arg1: i32) -> (i32, i32) {
    %c0_i32 = arith.constant 0 : i32
    %c0_i32_0 = arith.constant 0 : i32
    return %arg1, %c0_i32 : i32, i32
  }
  func.func @transform_2(%arg0: i32, %arg1: i32) -> (i32, i32) {
    %c0_i32 = arith.constant 0 : i32
    %c0_i32_0 = arith.constant 0 : i32
    %c0_i32_1 = arith.constant 0 : i32
    return %c0_i32, %c0_i32_0 : i32, i32
  }
  func.func @transform_3(%arg0: i32, %arg1: i32) -> (i32, i32) {
    %c0_i32 = arith.constant 0 : i32
    %c0_i32_0 = arith.constant 0 : i32
    return %arg0, %c0_i32 : i32, i32
  }
}

</mosaic_0001>

<llo_original>
// kernel: forward.1
$region0: #{forward.1}
  #allocation0 [shape = 'u32[]', space=smem, size = 0x4, offset = 0x4, fixed_abs, tag = 'smem constant byte address 0x4 - core index']
  #allocation1 [shape = 'u32[144,128]{1,0:T(1,128)}', space=vmem, size = 0x12000, scoped, tag = 'internal scratch']
  #allocation2 [shape = 'f32[16,512]{1,0:T(8,128)}', space=vmem, size = 0x8000, scoped, tag = 'scratch operand']
  %s0 = inlined_call_operand.vmem [shape: bf16[16,1024], index: 0, kind: input, shape index: {}]
  %s1 = inlined_call_operand.hbm [shape: bf16[1024,512], index: 1, kind: input, shape index: {}]
  %s2 = inlined_call_operand.hbm [shape: bf16[512,256], index: 2, kind: input, shape index: {}]
  %s3 = inlined_call_operand.vmem [shape: f32[16,256], index: 3, kind: output, shape index: {}]
  %s4 = sld [smem:[#allocation0]]
  $region38: #{forward.1} parent=0
    _
  %s6 = ssub.s32 1, %s4
  %s7 = scalar_select 0, %s6, %s4
  $region1: #{forward.1} parent=0
    #allocation3 [shape = 'u8[1048576]{0}', space=vmem, size = 0x100000, scoped, tag = 'input window, operand 1, single buffered']
    #allocation4 [shape = 's32[1]{0}', space=sflag, size = 0x4, scoped, tag = 'scoped memory for forward.1']
    #allocation5 [shape = 'u8[262144]{0}', space=vmem, size = 0x40000, scoped, tag = 'input window, operand 2, single buffered']
    #allocation6 [shape = 's32[1]{0}', space=sflag, size = 0x4, scoped, tag = 'scoped memory for forward.1']
    %8 = vsyncpa [#allocation4], 0
    %9 = vsyncpa [#allocation6], 0
    // Predicated region
    $region2: #{forward.1} parent=1 // pred_check
      _
    $region3: #{forward.1} parent=1 // pred_check_branch
      %11 = sbr.rel (0) target = $region5
    $region4: #{forward.1} parent=1 // pred_region
      _
    $region5: #{forward.1} parent=1 // pred_fallthru
      _
    // Predicated region
    $region6: #{forward.1} parent=1 // pred_check
      _
    $region7: #{forward.1} parent=1 // pred_check_branch
      %13 = sbr.rel (0) target = $region9
    $region8: #{forward.1} parent=1 // pred_region
      %s15 = ssub.s32 32768, 32768
      %16 = vsyncadd [#allocation4], %s15
      %s17 = sshll.u32 [#allocation3], 4
      %s18 = int_to_ptr.vmem [resolvable:$true] %s17
      %23 = dma.hbm_to_vmem [thread:$0]  %s1, 32768, %s18, [#allocation4], 256, 256, 16
    $region9: #{forward.1} parent=1 // pred_fallthru
      _
    // Predicated region
    $region10: #{forward.1} parent=1 // pred_check
      _
    $region11: #{forward.1} parent=1 // pred_check_branch
      %25 = sbr.rel (0) target = $region13
    $region12: #{forward.1} parent=1 // pred_region
      %s27 = ssub.s32 8192, 8192
      %28 = vsyncadd [#allocation6], %s27
      %s29 = sshll.u32 [#allocation5], 4
      %s30 = int_to_ptr.vmem [resolvable:$true] %s29
      %35 = dma.hbm_to_vmem [thread:$0]  %s2, 8192, %s30, [#allocation6], 128, 128, 8
    $region13: #{forward.1} parent=1 // pred_fallthru
      _
    // Predicated region
    $region14: #{forward.1} parent=1 // pred_check
      _
    $region15: #{forward.1} parent=1 // pred_check_branch
      %37 = sbr.rel (0) target = $region17
    $region16: #{forward.1} parent=1 // pred_region
      %38 = dma.done [#allocation4], 32768
    $region17: #{forward.1} parent=1 // pred_fallthru
      _
    // Predicated region
    $region18: #{forward.1} parent=1 // pred_check
      _
    $region19: #{forward.1} parent=1 // pred_check_branch
      %40 = sbr.rel (0) target = $region21
    $region20: #{forward.1} parent=1 // pred_region
      %41 = dma.done [#allocation6], 8192
    $region21: #{forward.1} parent=1 // pred_fallthru
      _
    %p42 = scmp.eq.s32.totalorder 0, 0
    // Predicated region
    $region22: #{forward.1} parent=1 // pred_check
      %p43 = pneg %p42
    $region23: #{forward.1} parent=1 // pred_check_branch
      %45 = sbr.rel (%p43) target = $region25
    $region24: #{forward.1} parent=1 // pred_region
      %46 = vst [vmem:[#allocation2] sm:$0xff] 0.0
      %47 = vst [vmem:[#allocation2 + $0x8] sm:$0xff] 0.0
      %48 = vst [vmem:[#allocation2 + $0x10] sm:$0xff] 0.0
      %49 = vst [vmem:[#allocation2 + $0x18] sm:$0xff] 0.0
      %50 = vst [vmem:[#allocation2 + $0x20] sm:$0xff] 0.0
      %51 = vst [vmem:[#allocation2 + $0x28] sm:$0xff] 0.0
      %52 = vst [vmem:[#allocation2 + $0x30] sm:$0xff] 0.0
      %53 = vst [vmem:[#allocation2 + $0x38] sm:$0xff] 0.0
    $region25: #{forward.1} parent=1 // pred_fallthru
      _
    %s54 = smul.u32 0, 1024
    %v55 = vld [vmem:[#allocation2] sm:$0xff]
    %v56 = vld [vmem:[#allocation2 + $0x8] sm:$0xff]
    %v57 = vld [vmem:[#allocation2 + $0x10] sm:$0xff]
    %v58 = vld [vmem:[#allocation2 + $0x18] sm:$0xff]
    %v59 = vld [vmem:[#allocation2 + $0x20] sm:$0xff]
    %v60 = vld [vmem:[#allocation2 + $0x28] sm:$0xff]
    %v61 = vld [vmem:[#allocation2 + $0x30] sm:$0xff]
    %v62 = vld [vmem:[#allocation2 + $0x38] sm:$0xff]
    %s63 = sshra.s32 %s54, 7
    %s64 = sand.u32 %s54, 127
    %s65 = smul.addr %s63, 4
    %s66 = scalar_lea.vmem %s0, %s65
    %v67 = vld [vmem:[%s66] sm:$0xff]
    %v68 = vld [vmem:[%s66 + $0x8] sm:$0xff]
    %v69 = vld [vmem:[%s66 + $0x10] sm:$0xff]
    %v70 = vld [vmem:[%s66 + $0x18] sm:$0xff]
    %v71 = vld [vmem:[%s66 + $0x20] sm:$0xff]
    %v72 = vld [vmem:[%s66 + $0x28] sm:$0xff]
    %v73 = vld [vmem:[%s66 + $0x30] sm:$0xff]
    %v74 = vld [vmem:[%s66 + $0x38] sm:$0xff]
    %v75 = vld [vmem:[#allocation3] sm:$0xff]
    %v76 = vld [vmem:[#allocation3 + $0x8] sm:$0xff]
    %v77 = vld [vmem:[#allocation3 + $0x10] sm:$0xff]
    %v78 = vld [vmem:[#allocation3 + $0x18] sm:$0xff]
    %v79 = vld [vmem:[#allocation3 + $0x20] sm:$0xff]
    %v80 = vld [vmem:[#allocation3 + $0x28] sm:$0xff]
    %v81 = vld [vmem:[#allocation3 + $0x30] sm:$0xff]
    %v82 = vld [vmem:[#allocation3 + $0x38] sm:$0xff]
    %v83 = vld [vmem:[#allocation3 + $0x40] sm:$0xff]
    %v84 = vld [vmem:[#allocation3 + $0x48] sm:$0xff]
    %v85 = vld [vmem:[#allocation3 + $0x50] sm:$0xff]
    %v86 = vld [vmem:[#allocation3 + $0x58] sm:$0xff]
    %v87 = vld [vmem:[#allocation3 + $0x60] sm:$0xff]
    %v88 = vld [vmem:[#allocation3 + $0x68] sm:$0xff]
    %v89 = vld [vmem:[#allocation3 + $0x70] sm:$0xff]
    %v90 = vld [vmem:[#allocation3 + $0x78] sm:$0xff]
    %v91 = vld [vmem:[#allocation3 + $0x80] sm:$0xff]
    %v92 = vld [vmem:[#allocation3 + $0x88] sm:$0xff]
    %v93 = vld [vmem:[#allocation3 + $0x90] sm:$0xff]
    %v94 = vld [vmem:[#allocation3 + $0x98] sm:$0xff]
    %v95 = vld [vmem:[#allocation3 + $0xa0] sm:$0xff]
    %v96 = vld [vmem:[#allocation3 + $0xa8] sm:$0xff]
    %v97 = vld [vmem:[#allocation3 + $0xb0] sm:$0xff]
    %v98 = vld [vmem:[#allocation3 + $0xb8] sm:$0xff]
    %v99 = vld [vmem:[#allocation3 + $0xc0] sm:$0xff]
    %v100 = vld [vmem:[#allocation3 + $0xc8] sm:$0xff]
    %v101 = vld [vmem:[#allocation3 + $0xd0] sm:$0xff]
    %v102 = vld [vmem:[#allocation3 + $0xd8] sm:$0xff]
    %v103 = vld [vmem:[#allocation3 + $0xe0] sm:$0xff]
    %v104 = vld [vmem:[#allocation3 + $0xe8] sm:$0xff]
    %v105 = vld [vmem:[#allocation3 + $0xf0] sm:$0xff]
    %v106 = vld [vmem:[#allocation3 + $0xf8] sm:$0xff]
    %v107 = vld [vmem:[#allocation3 + $0x100] sm:$0xff]
    %v108 = vld [vmem:[#allocation3 + $0x108] sm:$0xff]
    %v109 = vld [vmem:[#allocation3 + $0x110] sm:$0xff]
    %v110 = vld [vmem:[#allocation3 + $0x118] sm:$0xff]
    %v111 = vld [vmem:[#allocation3 + $0x120] sm:$0xff]
    %v112 = vld [vmem:[#allocation3 + $0x128] sm:$0xff]
    %v113 = vld [vmem:[#allocation3 + $0x130] sm:$0xff]
    %v114 = vld [vmem:[#allocation3 + $0x138] sm:$0xff]
    %v115 = vld [vmem:[#allocation3 + $0x140] sm:$0xff]
    %v116 = vld [vmem:[#allocation3 + $0x148] sm:$0xff]
    %v117 = vld [vmem:[#allocation3 + $0x150] sm:$0xff]
    %v118 = vld [vmem:[#allocation3 + $0x158] sm:$0xff]
    %v119 = vld [vmem:[#allocation3 + $0x160] sm:$0xff]
    %v120 = vld [vmem:[#allocation3 + $0x168] sm:$0xff]
    %v121 = vld [vmem:[#allocation3 + $0x170] sm:$0xff]
    %v122 = vld [vmem:[#allocation3 + $0x178] sm:$0xff]
    %v123 = vld [vmem:[#allocation3 + $0x180] sm:$0xff]
    %v124 = vld [vmem:[#allocation3 + $0x188] sm:$0xff]
    %v125 = vld [vmem:[#allocation3 + $0x190] sm:$0xff]
    %v126 = vld [vmem:[#allocation3 + $0x198] sm:$0xff]
    %v127 = vld [vmem:[#allocation3 + $0x1a0] sm:$0xff]
    %v128 = vld [vmem:[#allocation3 + $0x1a8] sm:$0xff]
    %v129 = vld [vmem:[#allocation3 + $0x1b0] sm:$0xff]
    %v130 = vld [vmem:[#allocation3 + $0x1b8] sm:$0xff]
    %v131 = vld [vmem:[#allocation3 + $0x1c0] sm:$0xff]
    %v132 = vld [vmem:[#allocation3 + $0x1c8] sm:$0xff]
    %v133 = vld [vmem:[#allocation3 + $0x1d0] sm:$0xff]
    %v134 = vld [vmem:[#allocation3 + $0x1d8] sm:$0xff]
    %v135 = vld [vmem:[#allocation3 + $0x1e0] sm:$0xff]
    %v136 = vld [vmem:[#allocation3 + $0x1e8] sm:$0xff]
    %v137 = vld [vmem:[#allocation3 + $0x1f0] sm:$0xff]
    %v138 = vld [vmem:[#allocation3 + $0x1f8] sm:$0xff]
    %v139 = vld [vmem:[#allocation3 + $0x200] sm:$0xff]
    %v140 = vld [vmem:[#allocation3 + $0x208] sm:$0xff]
    %v141 = vld [vmem:[#allocation3 + $0x210] sm:$0xff]
    %v142 = vld [vmem:[#allocation3 + $0x218] sm:$0xff]
    %v143 = vld [vmem:[#allocation3 + $0x220] sm:$0xff]
    %v144 = vld [vmem:[#allocation3 + $0x228] sm:$0xff]
    %v145 = vld [vmem:[#allocation3 + $0x230] sm:$0xff]
    %v146 = vld [vmem:[#allocation3 + $0x238] sm:$0xff]
    %v147 = vld [vmem:[#allocation3 + $0x240] sm:$0xff]
    %v148 = vld [vmem:[#allocation3 + $0x248] sm:$0xff]
    %v149 = vld [vmem:[#allocation3 + $0x250] sm:$0xff]
    %v150 = vld [vmem:[#allocation3 + $0x258] sm:$0xff]
    %v151 = vld [vmem:[#allocation3 + $0x260] sm:$0xff]
    %v152 = vld [vmem:[#allocation3 + $0x268] sm:$0xff]
    %v153 = vld [vmem:[#allocation3 + $0x270] sm:$0xff]
    %v154 = vld [vmem:[#allocation3 + $0x278] sm:$0xff]
    %v155 = vld [vmem:[#allocation3 + $0x280] sm:$0xff]
    %v156 = vld [vmem:[#allocation3 + $0x288] sm:$0xff]
    %v157 = vld [vmem:[#allocation3 + $0x290] sm:$0xff]
    %v158 = vld [vmem:[#allocation3 + $0x298] sm:$0xff]
    %v159 = vld [vmem:[#allocation3 + $0x2a0] sm:$0xff]
    %v160 = vld [vmem:[#allocation3 + $0x2a8] sm:$0xff]
    %v161 = vld [vmem:[#allocation3 + $0x2b0] sm:$0xff]
    %v162 = vld [vmem:[#allocation3 + $0x2b8] sm:$0xff]
    %v163 = vld [vmem:[#allocation3 + $0x2c0] sm:$0xff]
    %v164 = vld [vmem:[#allocation3 + $0x2c8] sm:$0xff]
    %v165 = vld [vmem:[#allocation3 + $0x2d0] sm:$0xff]
    %v166 = vld [vmem:[#allocation3 + $0x2d8] sm:$0xff]
    %v167 = vld [vmem:[#allocation3 + $0x2e0] sm:$0xff]
    %v168 = vld [vmem:[#allocation3 + $0x2e8] sm:$0xff]
    %v169 = vld [vmem:[#allocation3 + $0x2f0] sm:$0xff]
    %v170 = vld [vmem:[#allocation3 + $0x2f8] sm:$0xff]
    %v171 = vld [vmem:[#allocation3 + $0x300] sm:$0xff]
    %v172 = vld [vmem:[#allocation3 + $0x308] sm:$0xff]
    %v173 = vld [vmem:[#allocation3 + $0x310] sm:$0xff]
    %v174 = vld [vmem:[#allocation3 + $0x318] sm:$0xff]
    %v175 = vld [vmem:[#allocation3 + $0x320] sm:$0xff]
    %v176 = vld [vmem:[#allocation3 + $0x328] sm:$0xff]
    %v177 = vld [vmem:[#allocation3 + $0x330] sm:$0xff]
    %v178 = vld [vmem:[#allocation3 + $0x338] sm:$0xff]
    %v179 = vld [vmem:[#allocation3 + $0x340] sm:$0xff]
    %v180 = vld [vmem:[#allocation3 + $0x348] sm:$0xff]
    %v181 = vld [vmem:[#allocation3 + $0x350] sm:$0xff]
    %v182 = vld [vmem:[#allocation3 + $0x358] sm:$0xff]
    %v183 = vld [vmem:[#allocation3 + $0x360] sm:$0xff]
    %v184 = vld [vmem:[#allocation3 + $0x368] sm:$0xff]
    %v185 = vld [vmem:[#allocation3 + $0x370] sm:$0xff]
    %v186 = vld [vmem:[#allocation3 + $0x378] sm:$0xff]
    %v187 = vld [vmem:[#allocation3 + $0x380] sm:$0xff]
    %v188 = vld [vmem:[#allocation3 + $0x388] sm:$0xff]
    %v189 = vld [vmem:[#allocation3 + $0x390] sm:$0xff]
    %v190 = vld [vmem:[#allocation3 + $0x398] sm:$0xff]
    %v191 = vld [vmem:[#allocation3 + $0x3a0] sm:$0xff]
    %v192 = vld [vmem:[#allocation3 + $0x3a8] sm:$0xff]
    %v193 = vld [vmem:[#allocation3 + $0x3b0] sm:$0xff]
    %v194 = vld [vmem:[#allocation3 + $0x3b8] sm:$0xff]
    %v195 = vld [vmem:[#allocation3 + $0x3c0] sm:$0xff]
    %v196 = vld [vmem:[#allocation3 + $0x3c8] sm:$0xff]
    %v197 = vld [vmem:[#allocation3 + $0x3d0] sm:$0xff]
    %v198 = vld [vmem:[#allocation3 + $0x3d8] sm:$0xff]
    %v199 = vld [vmem:[#allocation3 + $0x3e0] sm:$0xff]
    %v200 = vld [vmem:[#allocation3 + $0x3e8] sm:$0xff]
    %v201 = vld [vmem:[#allocation3 + $0x3f0] sm:$0xff]
    %v202 = vld [vmem:[#allocation3 + $0x3f8] sm:$0xff]
    %v203 = vld [vmem:[#allocation3 + $0x400] sm:$0xff]
    %v204 = vld [vmem:[#allocation3 + $0x408] sm:$0xff]
    %v205 = vld [vmem:[#allocation3 + $0x410] sm:$0xff]
    %v206 = vld [vmem:[#allocation3 + $0x418] sm:$0xff]
    %v207 = vld [vmem:[#allocation3 + $0x420] sm:$0xff]
    %v208 = vld [vmem:[#allocation3 + $0x428] sm:$0xff]
    %v209 = vld [vmem:[#allocation3 + $0x430] sm:$0xff]
    %v210 = vld [vmem:[#allocation3 + $0x438] sm:$0xff]
    %v211 = vld [vmem:[#allocation3 + $0x440] sm:$0xff]
    %v212 = vld [vmem:[#allocation3 + $0x448] sm:$0xff]
    %v213 = vld [vmem:[#allocation3 + $0x450] sm:$0xff]
    %v214 = vld [vmem:[#allocation3 + $0x458] sm:$0xff]
    %v215 = vld [vmem:[#allocation3 + $0x460] sm:$0xff]
    %v216 = vld [vmem:[#allocation3 + $0x468] sm:$0xff]
    %v217 = vld [vmem:[#allocation3 + $0x470] sm:$0xff]
    %v218 = vld [vmem:[#allocation3 + $0x478] sm:$0xff]
    %v219 = vld [vmem:[#allocation3 + $0x480] sm:$0xff]
    %v220 = vld [vmem:[#allocation3 + $0x488] sm:$0xff]
    %v221 = vld [vmem:[#allocation3 + $0x490] sm:$0xff]
    %v222 = vld [vmem:[#allocation3 + $0x498] sm:$0xff]
    %v223 = vld [vmem:[#allocation3 + $0x4a0] sm:$0xff]
    %v224 = vld [vmem:[#allocation3 + $0x4a8] sm:$0xff]
    %v225 = vld [vmem:[#allocation3 + $0x4b0] sm:$0xff]
    %v226 = vld [vmem:[#allocation3 + $0x4b8] sm:$0xff]
    %v227 = vld [vmem:[#allocation3 + $0x4c0] sm:$0xff]
    %v228 = vld [vmem:[#allocation3 + $0x4c8] sm:$0xff]
    %v229 = vld [vmem:[#allocation3 + $0x4d0] sm:$0xff]
    %v230 = vld [vmem:[#allocation3 + $0x4d8] sm:$0xff]
    %v231 = vld [vmem:[#allocation3 + $0x4e0] sm:$0xff]
    %v232 = vld [vmem:[#allocation3 + $0x4e8] sm:$0xff]
    %v233 = vld [vmem:[#allocation3 + $0x4f0] sm:$0xff]
    %v234 = vld [vmem:[#allocation3 + $0x4f8] sm:$0xff]
    %v235 = vld [vmem:[#allocation3 + $0x500] sm:$0xff]
    %v236 = vld [vmem:[#allocation3 + $0x508] sm:$0xff]
    %v237 = vld [vmem:[#allocation3 + $0x510] sm:$0xff]
    %v238 = vld [vmem:[#allocation3 + $0x518] sm:$0xff]
    %v239 = vld [vmem:[#allocation3 + $0x520] sm:$0xff]
    %v240 = vld [vmem:[#allocation3 + $0x528] sm:$0xff]
    %v241 = vld [vmem:[#allocation3 + $0x530] sm:$0xff]
    %v242 = vld [vmem:[#allocation3 + $0x538] sm:$0xff]
    %v243 = vld [vmem:[#allocation3 + $0x540] sm:$0xff]
    %v244 = vld [vmem:[#allocation3 + $0x548] sm:$0xff]
    %v245 = vld [vmem:[#allocation3 + $0x550] sm:$0xff]
    %v246 = vld [vmem:[#allocation3 + $0x558] sm:$0xff]
    %v247 = vld [vmem:[#allocation3 + $0x560] sm:$0xff]
    %v248 = vld [vmem:[#allocation3 + $0x568] sm:$0xff]
    %v249 = vld [vmem:[#allocation3 + $0x570] sm:$0xff]
    %v250 = vld [vmem:[#allocation3 + $0x578] sm:$0xff]
    %v251 = vld [vmem:[#allocation3 + $0x580] sm:$0xff]
    %v252 = vld [vmem:[#allocation3 + $0x588] sm:$0xff]
    %v253 = vld [vmem:[#allocation3 + $0x590] sm:$0xff]
    %v254 = vld [vmem:[#allocation3 + $0x598] sm:$0xff]
    %v255 = vld [vmem:[#allocation3 + $0x5a0] sm:$0xff]
    %v256 = vld [vmem:[#allocation3 + $0x5a8] sm:$0xff]
    %v257 = vld [vmem:[#allocation3 + $0x5b0] sm:$0xff]
    %v258 = vld [vmem:[#allocation3 + $0x5b8] sm:$0xff]
    %v259 = vld [vmem:[#allocation3 + $0x5c0] sm:$0xff]
    %v260 = vld [vmem:[#allocation3 + $0x5c8] sm:$0xff]
    %v261 = vld [vmem:[#allocation3 + $0x5d0] sm:$0xff]
    %v262 = vld [vmem:[#allocation3 + $0x5d8] sm:$0xff]
    %v263 = vld [vmem:[#allocation3 + $0x5e0] sm:$0xff]
    %v264 = vld [vmem:[#allocation3 + $0x5e8] sm:$0xff]
    %v265 = vld [vmem:[#allocation3 + $0x5f0] sm:$0xff]
    %v266 = vld [vmem:[#allocation3 + $0x5f8] sm:$0xff]
    %v267 = vld [vmem:[#allocation3 + $0x600] sm:$0xff]
    %v268 = vld [vmem:[#allocation3 + $0x608] sm:$0xff]
    %v269 = vld [vmem:[#allocation3 + $0x610] sm:$0xff]
    %v270 = vld [vmem:[#allocation3 + $0x618] sm:$0xff]
    %v271 = vld [vmem:[#allocation3 + $0x620] sm:$0xff]
    %v272 = vld [vmem:[#allocation3 + $0x628] sm:$0xff]
    %v273 = vld [vmem:[#allocation3 + $0x630] sm:$0xff]
    %v274 = vld [vmem:[#allocation3 + $0x638] sm:$0xff]
    %v275 = vld [vmem:[#allocation3 + $0x640] sm:$0xff]
    %v276 = vld [vmem:[#allocation3 + $0x648] sm:$0xff]
    %v277 = vld [vmem:[#allocation3 + $0x650] sm:$0xff]
    %v278 = vld [vmem:[#allocation3 + $0x658] sm:$0xff]
    %v279 = vld [vmem:[#allocation3 + $0x660] sm:$0xff]
    %v280 = vld [vmem:[#allocation3 + $0x668] sm:$0xff]
    %v281 = vld [vmem:[#allocation3 + $0x670] sm:$0xff]
    %v282 = vld [vmem:[#allocation3 + $0x678] sm:$0xff]
    %v283 = vld [vmem:[#allocation3 + $0x680] sm:$0xff]
    %v284 = vld [vmem:[#allocation3 + $0x688] sm:$0xff]
    %v285 = vld [vmem:[#allocation3 + $0x690] sm:$0xff]
    %v286 = vld [vmem:[#allocation3 + $0x698] sm:$0xff]
    %v287 = vld [vmem:[#allocation3 + $0x6a0] sm:$0xff]
    %v288 = vld [vmem:[#allocation3 + $0x6a8] sm:$0xff]
    %v289 = vld [vmem:[#allocation3 + $0x6b0] sm:$0xff]
    %v290 = vld [vmem:[#allocation3 + $0x6b8] sm:$0xff]
    %v291 = vld [vmem:[#allocation3 + $0x6c0] sm:$0xff]
    %v292 = vld [vmem:[#allocation3 + $0x6c8] sm:$0xff]
    %v293 = vld [vmem:[#allocation3 + $0x6d0] sm:$0xff]
    %v294 = vld [vmem:[#allocation3 + $0x6d8] sm:$0xff]
    %v295 = vld [vmem:[#allocation3 + $0x6e0] sm:$0xff]
    %v296 = vld [vmem:[#allocation3 + $0x6e8] sm:$0xff]
    %v297 = vld [vmem:[#allocation3 + $0x6f0] sm:$0xff]
    %v298 = vld [vmem:[#allocation3 + $0x6f8] sm:$0xff]
    %v299 = vld [vmem:[#allocation3 + $0x700] sm:$0xff]
    %v300 = vld [vmem:[#allocation3 + $0x708] sm:$0xff]
    %v301 = vld [vmem:[#allocation3 + $0x710] sm:$0xff]
    %v302 = vld [vmem:[#allocation3 + $0x718] sm:$0xff]
    %v303 = vld [vmem:[#allocation3 + $0x720] sm:$0xff]
    %v304 = vld [vmem:[#allocation3 + $0x728] sm:$0xff]
    %v305 = vld [vmem:[#allocation3 + $0x730] sm:$0xff]
    %v306 = vld [vmem:[#allocation3 + $0x738] sm:$0xff]
    %v307 = vld [vmem:[#allocation3 + $0x740] sm:$0xff]
    %v308 = vld [vmem:[#allocation3 + $0x748] sm:$0xff]
    %v309 = vld [vmem:[#allocation3 + $0x750] sm:$0xff]
    %v310 = vld [vmem:[#allocation3 + $0x758] sm:$0xff]
    %v311 = vld [vmem:[#allocation3 + $0x760] sm:$0xff]
    %v312 = vld [vmem:[#allocation3 + $0x768] sm:$0xff]
    %v313 = vld [vmem:[#allocation3 + $0x770] sm:$0xff]
    %v314 = vld [vmem:[#allocation3 + $0x778] sm:$0xff]
    %v315 = vld [vmem:[#allocation3 + $0x780] sm:$0xff]
    %v316 = vld [vmem:[#allocation3 + $0x788] sm:$0xff]
    %v317 = vld [vmem:[#allocation3 + $0x790] sm:$0xff]
    %v318 = vld [vmem:[#allocation3 + $0x798] sm:$0xff]
    %v319 = vld [vmem:[#allocation3 + $0x7a0] sm:$0xff]
    %v320 = vld [vmem:[#allocation3 + $0x7a8] sm:$0xff]
    %v321 = vld [vmem:[#allocation3 + $0x7b0] sm:$0xff]
    %v322 = vld [vmem:[#allocation3 + $0x7b8] sm:$0xff]
    %v323 = vld [vmem:[#allocation3 + $0x7c0] sm:$0xff]
    %v324 = vld [vmem:[#allocation3 + $0x7c8] sm:$0xff]
    %v325 = vld [vmem:[#allocation3 + $0x7d0] sm:$0xff]
    %v326 = vld [vmem:[#allocation3 + $0x7d8] sm:$0xff]
    %v327 = vld [vmem:[#allocation3 + $0x7e0] sm:$0xff]
    %v328 = vld [vmem:[#allocation3 + $0x7e8] sm:$0xff]
    %v329 = vld [vmem:[#allocation3 + $0x7f0] sm:$0xff]
    %v330 = vld [vmem:[#allocation3 + $0x7f8] sm:$0xff]
    %v339 = vunpack.c.l.b16 %v67
    %v340 = vunpack.c.h.b16 %v67
    %v341 = vunpack.c.l.b16 %v68
    %v342 = vunpack.c.h.b16 %v68
    %v343 = vunpack.c.l.b16 %v69
    %v344 = vunpack.c.h.b16 %v69
    %v345 = vunpack.c.l.b16 %v70
    %v346 = vunpack.c.h.b16 %v70
    %v347 = vunpack.c.l.b16 %v71
    %v348 = vunpack.c.h.b16 %v71
    %v349 = vunpack.c.l.b16 %v72
    %v350 = vunpack.c.h.b16 %v72
    %v351 = vunpack.c.l.b16 %v73
    %v352 = vunpack.c.h.b16 %v73
    %v353 = vunpack.c.l.b16 %v74
    %v354 = vunpack.c.h.b16 %v74
    %v355 = vpack.c.b16 %v347, %v339
    %v356 = vpack.c.b16 %v348, %v340
    %v357 = vpack.c.b16 %v349, %v341
    %v358 = vpack.c.b16 %v350, %v342
    %v359 = vpack.c.b16 %v351, %v343
    %v360 = vpack.c.b16 %v352, %v344
    %v361 = vpack.c.b16 %v353, %v345
    %v362 = vpack.c.b16 %v354, %v346
    %v627 = vunpack.c.l.b16 %v75
    %v628 = vunpack.c.h.b16 %v75
    %v629 = vunpack.c.l.b16 %v76
    %v630 = vunpack.c.h.b16 %v76
    %v631 = vunpack.c.l.b16 %v77
    %v632 = vunpack.c.h.b16 %v77
    %v633 = vunpack.c.l.b16 %v78
    %v634 = vunpack.c.h.b16 %v78
    %v635 = vunpack.c.l.b16 %v79
    %v636 = vunpack.c.h.b16 %v79
    %v637 = vunpack.c.l.b16 %v80
    %v638 = vunpack.c.h.b16 %v80
    %v639 = vunpack.c.l.b16 %v81
    %v640 = vunpack.c.h.b16 %v81
    %v641 = vunpack.c.l.b16 %v82
    %v642 = vunpack.c.h.b16 %v82
    %v643 = vunpack.c.l.b16 %v83
    %v644 = vunpack.c.h.b16 %v83
    %v645 = vunpack.c.l.b16 %v84
    %v646 = vunpack.c.h.b16 %v84
    %v647 = vunpack.c.l.b16 %v85
    %v648 = vunpack.c.h.b16 %v85
    %v649 = vunpack.c.l.b16 %v86
    %v650 = vunpack.c.h.b16 %v86
    %v651 = vunpack.c.l.b16 %v87
    %v652 = vunpack.c.h.b16 %v87
    %v653 = vunpack.c.l.b16 %v88
    %v654 = vunpack.c.h.b16 %v88
    %v655 = vunpack.c.l.b16 %v89
    %v656 = vunpack.c.h.b16 %v89
    %v657 = vunpack.c.l.b16 %v90
    %v658 = vunpack.c.h.b16 %v90
    %v659 = vunpack.c.l.b16 %v91
    %v660 = vunpack.c.h.b16 %v91
    %v661 = vunpack.c.l.b16 %v92
    %v662 = vunpack.c.h.b16 %v92
    %v663 = vunpack.c.l.b16 %v93
    %v664 = vunpack.c.h.b16 %v93
    %v665 = vunpack.c.l.b16 %v94
    %v666 = vunpack.c.h.b16 %v94
    %v667 = vunpack.c.l.b16 %v95
    %v668 = vunpack.c.h.b16 %v95
    %v669 = vunpack.c.l.b16 %v96
    %v670 = vunpack.c.h.b16 %v96
    %v671 = vunpack.c.l.b16 %v97
    %v672 = vunpack.c.h.b16 %v97
    %v673 = vunpack.c.l.b16 %v98
    %v674 = vunpack.c.h.b16 %v98
    %v675 = vunpack.c.l.b16 %v99
    %v676 = vunpack.c.h.b16 %v99
    %v677 = vunpack.c.l.b16 %v100
    %v678 = vunpack.c.h.b16 %v100
    %v679 = vunpack.c.l.b16 %v101
    %v680 = vunpack.c.h.b16 %v101
    %v681 = vunpack.c.l.b16 %v102
    %v682 = vunpack.c.h.b16 %v102
    %v683 = vunpack.c.l.b16 %v103
    %v684 = vunpack.c.h.b16 %v103
    %v685 = vunpack.c.l.b16 %v104
    %v686 = vunpack.c.h.b16 %v104
    %v687 = vunpack.c.l.b16 %v105
    %v688 = vunpack.c.h.b16 %v105
    %v689 = vunpack.c.l.b16 %v106
    %v690 = vunpack.c.h.b16 %v106
    %v691 = vunpack.c.l.b16 %v107
    %v692 = vunpack.c.h.b16 %v107
    %v693 = vunpack.c.l.b16 %v108
    %v694 = vunpack.c.h.b16 %v108
    %v695 = vunpack.c.l.b16 %v109
    %v696 = vunpack.c.h.b16 %v109
    %v697 = vunpack.c.l.b16 %v110
    %v698 = vunpack.c.h.b16 %v110
    %v699 = vunpack.c.l.b16 %v111
    %v700 = vunpack.c.h.b16 %v111
    %v701 = vunpack.c.l.b16 %v112
    %v702 = vunpack.c.h.b16 %v112
    %v703 = vunpack.c.l.b16 %v113
    %v704 = vunpack.c.h.b16 %v113
    %v705 = vunpack.c.l.b16 %v114
    %v706 = vunpack.c.h.b16 %v114
    %v707 = vunpack.c.l.b16 %v115
    %v708 = vunpack.c.h.b16 %v115
    %v709 = vunpack.c.l.b16 %v116
    %v710 = vunpack.c.h.b16 %v116
    %v711 = vunpack.c.l.b16 %v117
    %v712 = vunpack.c.h.b16 %v117
    %v713 = vunpack.c.l.b16 %v118
    %v714 = vunpack.c.h.b16 %v118
    %v715 = vunpack.c.l.b16 %v119
    %v716 = vunpack.c.h.b16 %v119
    %v717 = vunpack.c.l.b16 %v120
    %v718 = vunpack.c.h.b16 %v120
    %v719 = vunpack.c.l.b16 %v121
    %v720 = vunpack.c.h.b16 %v121
    %v721 = vunpack.c.l.b16 %v122
    %v722 = vunpack.c.h.b16 %v122
    %v723 = vunpack.c.l.b16 %v123
    %v724 = vunpack.c.h.b16 %v123
    %v725 = vunpack.c.l.b16 %v124
    %v726 = vunpack.c.h.b16 %v124
    %v727 = vunpack.c.l.b16 %v125
    %v728 = vunpack.c.h.b16 %v125
    %v729 = vunpack.c.l.b16 %v126
    %v730 = vunpack.c.h.b16 %v126
    %v731 = vunpack.c.l.b16 %v127
    %v732 = vunpack.c.h.b16 %v127
    %v733 = vunpack.c.l.b16 %v128
    %v734 = vunpack.c.h.b16 %v128
    %v735 = vunpack.c.l.b16 %v129
    %v736 = vunpack.c.h.b16 %v129
    %v737 = vunpack.c.l.b16 %v130
    %v738 = vunpack.c.h.b16 %v130
    %v739 = vunpack.c.l.b16 %v131
    %v740 = vunpack.c.h.b16 %v131
    %v741 = vunpack.c.l.b16 %v132
    %v742 = vunpack.c.h.b16 %v132
    %v743 = vunpack.c.l.b16 %v133
    %v744 = vunpack.c.h.b16 %v133
    %v745 = vunpack.c.l.b16 %v134
    %v746 = vunpack.c.h.b16 %v134
    %v747 = vunpack.c.l.b16 %v135
    %v748 = vunpack.c.h.b16 %v135
    %v749 = vunpack.c.l.b16 %v136
    %v750 = vunpack.c.h.b16 %v136
    %v751 = vunpack.c.l.b16 %v137
    %v752 = vunpack.c.h.b16 %v137
    %v753 = vunpack.c.l.b16 %v138
    %v754 = vunpack.c.h.b16 %v138
    %v755 = vunpack.c.l.b16 %v139
    %v756 = vunpack.c.h.b16 %v139
    %v757 = vunpack.c.l.b16 %v140
    %v758 = vunpack.c.h.b16 %v140
    %v759 = vunpack.c.l.b16 %v141
    %v760 = vunpack.c.h.b16 %v141
    %v761 = vunpack.c.l.b16 %v142
    %v762 = vunpack.c.h.b16 %v142
    %v763 = vunpack.c.l.b16 %v143
    %v764 = vunpack.c.h.b16 %v143
    %v765 = vunpack.c.l.b16 %v144
    %v766 = vunpack.c.h.b16 %v144
    %v767 = vunpack.c.l.b16 %v145
    %v768 = vunpack.c.h.b16 %v145
    %v769 = vunpack.c.l.b16 %v146
    %v770 = vunpack.c.h.b16 %v146
    %v771 = vunpack.c.l.b16 %v147
    %v772 = vunpack.c.h.b16 %v147
    %v773 = vunpack.c.l.b16 %v148
    %v774 = vunpack.c.h.b16 %v148
    %v775 = vunpack.c.l.b16 %v149
    %v776 = vunpack.c.h.b16 %v149
    %v777 = vunpack.c.l.b16 %v150
    %v778 = vunpack.c.h.b16 %v150
    %v779 = vunpack.c.l.b16 %v151
    %v780 = vunpack.c.h.b16 %v151
    %v781 = vunpack.c.l.b16 %v152
    %v782 = vunpack.c.h.b16 %v152
    %v783 = vunpack.c.l.b16 %v153
    %v784 = vunpack.c.h.b16 %v153
    %v785 = vunpack.c.l.b16 %v154
    %v786 = vunpack.c.h.b16 %v154
    %v787 = vunpack.c.l.b16 %v155
    %v788 = vunpack.c.h.b16 %v155
    %v789 = vunpack.c.l.b16 %v156
    %v790 = vunpack.c.h.b16 %v156
    %v791 = vunpack.c.l.b16 %v157
    %v792 = vunpack.c.h.b16 %v157
    %v793 = vunpack.c.l.b16 %v158
    %v794 = vunpack.c.h.b16 %v158
    %v795 = vunpack.c.l.b16 %v159
    %v796 = vunpack.c.h.b16 %v159
    %v797 = vunpack.c.l.b16 %v160
    %v798 = vunpack.c.h.b16 %v160
    %v799 = vunpack.c.l.b16 %v161
    %v800 = vunpack.c.h.b16 %v161
    %v801 = vunpack.c.l.b16 %v162
    %v802 = vunpack.c.h.b16 %v162
    %v803 = vunpack.c.l.b16 %v163
    %v804 = vunpack.c.h.b16 %v163
    %v805 = vunpack.c.l.b16 %v164
    %v806 = vunpack.c.h.b16 %v164
    %v807 = vunpack.c.l.b16 %v165
    %v808 = vunpack.c.h.b16 %v165
    %v809 = vunpack.c.l.b16 %v166
    %v810 = vunpack.c.h.b16 %v166
    %v811 = vunpack.c.l.b16 %v167
    %v812 = vunpack.c.h.b16 %v167
    %v813 = vunpack.c.l.b16 %v168
    %v814 = vunpack.c.h.b16 %v168
    %v815 = vunpack.c.l.b16 %v169
    %v816 = vunpack.c.h.b16 %v169
    %v817 = vunpack.c.l.b16 %v170
    %v818 = vunpack.c.h.b16 %v170
    %v819 = vunpack.c.l.b16 %v171
    %v820 = vunpack.c.h.b16 %v171
    %v821 = vunpack.c.l.b16 %v172
    %v822 = vunpack.c.h.b16 %v172
    %v823 = vunpack.c.l.b16 %v173
    %v824 = vunpack.c.h.b16 %v173
    %v825 = vunpack.c.l.b16 %v174
    %v826 = vunpack.c.h.b16 %v174
    %v827 = vunpack.c.l.b16 %v175
    %v828 = vunpack.c.h.b16 %v175
    %v829 = vunpack.c.l.b16 %v176
    %v830 = vunpack.c.h.b16 %v176
    %v831 = vunpack.c.l.b16 %v177
    %v832 = vunpack.c.h.b16 %v177
    %v833 = vunpack.c.l.b16 %v178
    %v834 = vunpack.c.h.b16 %v178
    %v835 = vunpack.c.l.b16 %v179
    %v836 = vunpack.c.h.b16 %v179
    %v837 = vunpack.c.l.b16 %v180
    %v838 = vunpack.c.h.b16 %v180
    %v839 = vunpack.c.l.b16 %v181
    %v840 = vunpack.c.h.b16 %v181
    %v841 = vunpack.c.l.b16 %v182
    %v842 = vunpack.c.h.b16 %v182
    %v843 = vunpack.c.l.b16 %v183
    %v844 = vunpack.c.h.b16 %v183
    %v845 = vunpack.c.l.b16 %v184
    %v846 = vunpack.c.h.b16 %v184
    %v847 = vunpack.c.l.b16 %v185
    %v848 = vunpack.c.h.b16 %v185
    %v849 = vunpack.c.l.b16 %v186
    %v850 = vunpack.c.h.b16 %v186
    %v851 = vunpack.c.l.b16 %v187
    %v852 = vunpack.c.h.b16 %v187
    %v853 = vunpack.c.l.b16 %v188
    %v854 = vunpack.c.h.b16 %v188
    %v855 = vunpack.c.l.b16 %v189
    %v856 = vunpack.c.h.b16 %v189
    %v857 = vunpack.c.l.b16 %v190
    %v858 = vunpack.c.h.b16 %v190
    %v859 = vunpack.c.l.b16 %v191
    %v860 = vunpack.c.h.b16 %v191
    %v861 = vunpack.c.l.b16 %v192
    %v862 = vunpack.c.h.b16 %v192
    %v863 = vunpack.c.l.b16 %v193
    %v864 = vunpack.c.h.b16 %v193
    %v865 = vunpack.c.l.b16 %v194
    %v866 = vunpack.c.h.b16 %v194
    %v867 = vunpack.c.l.b16 %v195
    %v868 = vunpack.c.h.b16 %v195
    %v869 = vunpack.c.l.b16 %v196
    %v870 = vunpack.c.h.b16 %v196
    %v871 = vunpack.c.l.b16 %v197
    %v872 = vunpack.c.h.b16 %v197
    %v873 = vunpack.c.l.b16 %v198
    %v874 = vunpack.c.h.b16 %v198
    %v875 = vunpack.c.l.b16 %v199
    %v876 = vunpack.c.h.b16 %v199
    %v877 = vunpack.c.l.b16 %v200
    %v878 = vunpack.c.h.b16 %v200
    %v879 = vunpack.c.l.b16 %v201
    %v880 = vunpack.c.h.b16 %v201
    %v881 = vunpack.c.l.b16 %v202
    %v882 = vunpack.c.h.b16 %v202
    %v883 = vunpack.c.l.b16 %v203
    %v884 = vunpack.c.h.b16 %v203
    %v885 = vunpack.c.l.b16 %v204
    %v886 = vunpack.c.h.b16 %v204
    %v887 = vunpack.c.l.b16 %v205
    %v888 = vunpack.c.h.b16 %v205
    %v889 = vunpack.c.l.b16 %v206
    %v890 = vunpack.c.h.b16 %v206
    %v891 = vunpack.c.l.b16 %v207
    %v892 = vunpack.c.h.b16 %v207
    %v893 = vunpack.c.l.b16 %v208
    %v894 = vunpack.c.h.b16 %v208
    %v895 = vunpack.c.l.b16 %v209
    %v896 = vunpack.c.h.b16 %v209
    %v897 = vunpack.c.l.b16 %v210
    %v898 = vunpack.c.h.b16 %v210
    %v899 = vunpack.c.l.b16 %v211
    %v900 = vunpack.c.h.b16 %v211
    %v901 = vunpack.c.l.b16 %v212
    %v902 = vunpack.c.h.b16 %v212
    %v903 = vunpack.c.l.b16 %v213
    %v904 = vunpack.c.h.b16 %v213
    %v905 = vunpack.c.l.b16 %v214
    %v906 = vunpack.c.h.b16 %v214
    %v907 = vunpack.c.l.b16 %v215
    %v908 = vunpack.c.h.b16 %v215
    %v909 = vunpack.c.l.b16 %v216
    %v910 = vunpack.c.h.b16 %v216
    %v911 = vunpack.c.l.b16 %v217
    %v912 = vunpack.c.h.b16 %v217
    %v913 = vunpack.c.l.b16 %v218
    %v914 = vunpack.c.h.b16 %v218
    %v915 = vunpack.c.l.b16 %v219
    %v916 = vunpack.c.h.b16 %v219
    %v917 = vunpack.c.l.b16 %v220
    %v918 = vunpack.c.h.b16 %v220
    %v919 = vunpack.c.l.b16 %v221
    %v920 = vunpack.c.h.b16 %v221
    %v921 = vunpack.c.l.b16 %v222
    %v922 = vunpack.c.h.b16 %v222
    %v923 = vunpack.c.l.b16 %v223
    %v924 = vunpack.c.h.b16 %v223
    %v925 = vunpack.c.l.b16 %v224
    %v926 = vunpack.c.h.b16 %v224
    %v927 = vunpack.c.l.b16 %v225
    %v928 = vunpack.c.h.b16 %v225
    %v929 = vunpack.c.l.b16 %v226
    %v930 = vunpack.c.h.b16 %v226
    %v931 = vunpack.c.l.b16 %v227
    %v932 = vunpack.c.h.b16 %v227
    %v933 = vunpack.c.l.b16 %v228
    %v934 = vunpack.c.h.b16 %v228
    %v935 = vunpack.c.l.b16 %v229
    %v936 = vunpack.c.h.b16 %v229
    %v937 = vunpack.c.l.b16 %v230
    %v938 = vunpack.c.h.b16 %v230
    %v939 = vunpack.c.l.b16 %v231
    %v940 = vunpack.c.h.b16 %v231
    %v941 = vunpack.c.l.b16 %v232
    %v942 = vunpack.c.h.b16 %v232
    %v943 = vunpack.c.l.b16 %v233
    %v944 = vunpack.c.h.b16 %v233
    %v945 = vunpack.c.l.b16 %v234
    %v946 = vunpack.c.h.b16 %v234
    %v947 = vunpack.c.l.b16 %v235
    %v948 = vunpack.c.h.b16 %v235
    %v949 = vunpack.c.l.b16 %v236
    %v950 = vunpack.c.h.b16 %v236
    %v951 = vunpack.c.l.b16 %v237
    %v952 = vunpack.c.h.b16 %v237
    %v953 = vunpack.c.l.b16 %v238
    %v954 = vunpack.c.h.b16 %v238
    %v955 = vunpack.c.l.b16 %v239
    %v956 = vunpack.c.h.b16 %v239
    %v957 = vunpack.c.l.b16 %v240
    %v958 = vunpack.c.h.b16 %v240
    %v959 = vunpack.c.l.b16 %v241
    %v960 = vunpack.c.h.b16 %v241
    %v961 = vunpack.c.l.b16 %v242
    %v962 = vunpack.c.h.b16 %v242
    %v963 = vunpack.c.l.b16 %v243
    %v964 = vunpack.c.h.b16 %v243
    %v965 = vunpack.c.l.b16 %v244
    %v966 = vunpack.c.h.b16 %v244
    %v967 = vunpack.c.l.b16 %v245
    %v968 = vunpack.c.h.b16 %v245
    %v969 = vunpack.c.l.b16 %v246
    %v970 = vunpack.c.h.b16 %v246
    %v971 = vunpack.c.l.b16 %v247
    %v972 = vunpack.c.h.b16 %v247
    %v973 = vunpack.c.l.b16 %v248
    %v974 = vunpack.c.h.b16 %v248
    %v975 = vunpack.c.l.b16 %v249
    %v976 = vunpack.c.h.b16 %v249
    %v977 = vunpack.c.l.b16 %v250
    %v978 = vunpack.c.h.b16 %v250
    %v979 = vunpack.c.l.b16 %v251
    %v980 = vunpack.c.h.b16 %v251
    %v981 = vunpack.c.l.b16 %v252
    %v982 = vunpack.c.h.b16 %v252
    %v983 = vunpack.c.l.b16 %v253
    %v984 = vunpack.c.h.b16 %v253
    %v985 = vunpack.c.l.b16 %v254
    %v986 = vunpack.c.h.b16 %v254
    %v987 = vunpack.c.l.b16 %v255
    %v988 = vunpack.c.h.b16 %v255
    %v989 = vunpack.c.l.b16 %v256
    %v990 = vunpack.c.h.b16 %v256
    %v991 = vunpack.c.l.b16 %v257
    %v992 = vunpack.c.h.b16 %v257
    %v993 = vunpack.c.l.b16 %v258
    %v994 = vunpack.c.h.b16 %v258
    %v995 = vunpack.c.l.b16 %v259
    %v996 = vunpack.c.h.b16 %v259
    %v997 = vunpack.c.l.b16 %v260
    %v998 = vunpack.c.h.b16 %v260
    %v999 = vunpack.c.l.b16 %v261
    %v1000 = vunpack.c.h.b16 %v261
    %v1001 = vunpack.c.l.b16 %v262
    %v1002 = vunpack.c.h.b16 %v262
    %v1003 = vunpack.c.l.b16 %v263
    %v1004 = vunpack.c.h.b16 %v263
    %v1005 = vunpack.c.l.b16 %v264
    %v1006 = vunpack.c.h.b16 %v264
    %v1007 = vunpack.c.l.b16 %v265
    %v1008 = vunpack.c.h.b16 %v265
    %v1009 = vunpack.c.l.b16 %v266
    %v1010 = vunpack.c.h.b16 %v266
    %v1011 = vunpack.c.l.b16 %v267
    %v1012 = vunpack.c.h.b16 %v267
    %v1013 = vunpack.c.l.b16 %v268
    %v1014 = vunpack.c.h.b16 %v268
    %v1015 = vunpack.c.l.b16 %v269
    %v1016 = vunpack.c.h.b16 %v269
    %v1017 = vunpack.c.l.b16 %v270
    %v1018 = vunpack.c.h.b16 %v270
    %v1019 = vunpack.c.l.b16 %v271
    %v1020 = vunpack.c.h.b16 %v271
    %v1021 = vunpack.c.l.b16 %v272
    %v1022 = vunpack.c.h.b16 %v272
    %v1023 = vunpack.c.l.b16 %v273
    %v1024 = vunpack.c.h.b16 %v273
    %v1025 = vunpack.c.l.b16 %v274
    %v1026 = vunpack.c.h.b16 %v274
    %v1027 = vunpack.c.l.b16 %v275
    %v1028 = vunpack.c.h.b16 %v275
    %v1029 = vunpack.c.l.b16 %v276
    %v1030 = vunpack.c.h.b16 %v276
    %v1031 = vunpack.c.l.b16 %v277
    %v1032 = vunpack.c.h.b16 %v277
    %v1033 = vunpack.c.l.b16 %v278
    %v1034 = vunpack.c.h.b16 %v278
    %v1035 = vunpack.c.l.b16 %v279
    %v1036 = vunpack.c.h.b16 %v279
    %v1037 = vunpack.c.l.b16 %v280
    %v1038 = vunpack.c.h.b16 %v280
    %v1039 = vunpack.c.l.b16 %v281
    %v1040 = vunpack.c.h.b16 %v281
    %v1041 = vunpack.c.l.b16 %v282
    %v1042 = vunpack.c.h.b16 %v282
    %v1043 = vunpack.c.l.b16 %v283
    %v1044 = vunpack.c.h.b16 %v283
    %v1045 = vunpack.c.l.b16 %v284
    %v1046 = vunpack.c.h.b16 %v284
    %v1047 = vunpack.c.l.b16 %v285
    %v1048 = vunpack.c.h.b16 %v285
    %v1049 = vunpack.c.l.b16 %v286
    %v1050 = vunpack.c.h.b16 %v286
    %v1051 = vunpack.c.l.b16 %v287
    %v1052 = vunpack.c.h.b16 %v287
    %v1053 = vunpack.c.l.b16 %v288
    %v1054 = vunpack.c.h.b16 %v288
    %v1055 = vunpack.c.l.b16 %v289
    %v1056 = vunpack.c.h.b16 %v289
    %v1057 = vunpack.c.l.b16 %v290
    %v1058 = vunpack.c.h.b16 %v290
    %v1059 = vunpack.c.l.b16 %v291
    %v1060 = vunpack.c.h.b16 %v291
    %v1061 = vunpack.c.l.b16 %v292
    %v1062 = vunpack.c.h.b16 %v292
    %v1063 = vunpack.c.l.b16 %v293
    %v1064 = vunpack.c.h.b16 %v293
    %v1065 = vunpack.c.l.b16 %v294
    %v1066 = vunpack.c.h.b16 %v294
    %v1067 = vunpack.c.l.b16 %v295
    %v1068 = vunpack.c.h.b16 %v295
    %v1069 = vunpack.c.l.b16 %v296
    %v1070 = vunpack.c.h.b16 %v296
    %v1071 = vunpack.c.l.b16 %v297
    %v1072 = vunpack.c.h.b16 %v297
    %v1073 = vunpack.c.l.b16 %v298
    %v1074 = vunpack.c.h.b16 %v298
    %v1075 = vunpack.c.l.b16 %v299
    %v1076 = vunpack.c.h.b16 %v299
    %v1077 = vunpack.c.l.b16 %v300
    %v1078 = vunpack.c.h.b16 %v300
    %v1079 = vunpack.c.l.b16 %v301
    %v1080 = vunpack.c.h.b16 %v301
    %v1081 = vunpack.c.l.b16 %v302
    %v1082 = vunpack.c.h.b16 %v302
    %v1083 = vunpack.c.l.b16 %v303
    %v1084 = vunpack.c.h.b16 %v303
    %v1085 = vunpack.c.l.b16 %v304
    %v1086 = vunpack.c.h.b16 %v304
    %v1087 = vunpack.c.l.b16 %v305
    %v1088 = vunpack.c.h.b16 %v305
    %v1089 = vunpack.c.l.b16 %v306
    %v1090 = vunpack.c.h.b16 %v306
    %v1091 = vunpack.c.l.b16 %v307
    %v1092 = vunpack.c.h.b16 %v307
    %v1093 = vunpack.c.l.b16 %v308
    %v1094 = vunpack.c.h.b16 %v308
    %v1095 = vunpack.c.l.b16 %v309
    %v1096 = vunpack.c.h.b16 %v309
    %v1097 = vunpack.c.l.b16 %v310
    %v1098 = vunpack.c.h.b16 %v310
    %v1099 = vunpack.c.l.b16 %v311
    %v1100 = vunpack.c.h.b16 %v311
    %v1101 = vunpack.c.l.b16 %v312
    %v1102 = vunpack.c.h.b16 %v312
    %v1103 = vunpack.c.l.b16 %v313
    %v1104 = vunpack.c.h.b16 %v313
    %v1105 = vunpack.c.l.b16 %v314
    %v1106 = vunpack.c.h.b16 %v314
    %v1107 = vunpack.c.l.b16 %v315
    %v1108 = vunpack.c.h.b16 %v315
    %v1109 = vunpack.c.l.b16 %v316
    %v1110 = vunpack.c.h.b16 %v316
    %v1111 = vunpack.c.l.b16 %v317
    %v1112 = vunpack.c.h.b16 %v317
    %v1113 = vunpack.c.l.b16 %v318
    %v1114 = vunpack.c.h.b16 %v318
    %v1115 = vunpack.c.l.b16 %v319
    %v1116 = vunpack.c.h.b16 %v319
    %v1117 = vunpack.c.l.b16 %v320
    %v1118 = vunpack.c.h.b16 %v320
    %v1119 = vunpack.c.l.b16 %v321
    %v1120 = vunpack.c.h.b16 %v321
    %v1121 = vunpack.c.l.b16 %v322
    %v1122 = vunpack.c.h.b16 %v322
    %v1123 = vunpack.c.l.b16 %v323
    %v1124 = vunpack.c.h.b16 %v323
    %v1125 = vunpack.c.l.b16 %v324
    %v1126 = vunpack.c.h.b16 %v324
    %v1127 = vunpack.c.l.b16 %v325
    %v1128 = vunpack.c.h.b16 %v325
    %v1129 = vunpack.c.l.b16 %v326
    %v1130 = vunpack.c.h.b16 %v326
    %v1131 = vunpack.c.l.b16 %v327
    %v1132 = vunpack.c.h.b16 %v327
    %v1133 = vunpack.c.l.b16 %v328
    %v1134 = vunpack.c.h.b16 %v328
    %v1135 = vunpack.c.l.b16 %v329
    %v1136 = vunpack.c.h.b16 %v329
    %v1137 = vunpack.c.l.b16 %v330
    %v1138 = vunpack.c.h.b16 %v330
    %v1139 = vpack.c.b16 %v631, %v627
    %v1140 = vpack.c.b16 %v632, %v628
    %v1141 = vpack.c.b16 %v633, %v629
    %v1142 = vpack.c.b16 %v634, %v630
    %v1143 = vpack.c.b16 %v639, %v635
    %v1144 = vpack.c.b16 %v640, %v636
    %v1145 = vpack.c.b16 %v641, %v637
    %v1146 = vpack.c.b16 %v642, %v638
    %v1147 = vpack.c.b16 %v647, %v643
    %v1148 = vpack.c.b16 %v648, %v644
    %v1149 = vpack.c.b16 %v649, %v645
    %v1150 = vpack.c.b16 %v650, %v646
    %v1151 = vpack.c.b16 %v655, %v651
    %v1152 = vpack.c.b16 %v656, %v652
    %v1153 = vpack.c.b16 %v657, %v653
    %v1154 = vpack.c.b16 %v658, %v654
    %v1155 = vpack.c.b16 %v663, %v659
    %v1156 = vpack.c.b16 %v664, %v660
    %v1157 = vpack.c.b16 %v665, %v661
    %v1158 = vpack.c.b16 %v666, %v662
    %v1159 = vpack.c.b16 %v671, %v667
    %v1160 = vpack.c.b16 %v672, %v668
    %v1161 = vpack.c.b16 %v673, %v669
    %v1162 = vpack.c.b16 %v674, %v670
    %v1163 = vpack.c.b16 %v679, %v675
    %v1164 = vpack.c.b16 %v680, %v676
    %v1165 = vpack.c.b16 %v681, %v677
    %v1166 = vpack.c.b16 %v682, %v678
    %v1167 = vpack.c.b16 %v687, %v683
    %v1168 = vpack.c.b16 %v688, %v684
    %v1169 = vpack.c.b16 %v689, %v685
    %v1170 = vpack.c.b16 %v690, %v686
    %v1171 = vpack.c.b16 %v695, %v691
    %v1172 = vpack.c.b16 %v696, %v692
    %v1173 = vpack.c.b16 %v697, %v693
    %v1174 = vpack.c.b16 %v698, %v694
    %v1175 = vpack.c.b16 %v703, %v699
    %v1176 = vpack.c.b16 %v704, %v700
    %v1177 = vpack.c.b16 %v705, %v701
    %v1178 = vpack.c.b16 %v706, %v702
    %v1179 = vpack.c.b16 %v711, %v707
    %v1180 = vpack.c.b16 %v712, %v708
    %v1181 = vpack.c.b16 %v713, %v709
    %v1182 = vpack.c.b16 %v714, %v710
    %v1183 = vpack.c.b16 %v719, %v715
    %v1184 = vpack.c.b16 %v720, %v716
    %v1185 = vpack.c.b16 %v721, %v717
    %v1186 = vpack.c.b16 %v722, %v718
    %v1187 = vpack.c.b16 %v727, %v723
    %v1188 = vpack.c.b16 %v728, %v724
    %v1189 = vpack.c.b16 %v729, %v725
    %v1190 = vpack.c.b16 %v730, %v726
    %v1191 = vpack.c.b16 %v735, %v731
    %v1192 = vpack.c.b16 %v736, %v732
    %v1193 = vpack.c.b16 %v737, %v733
    %v1194 = vpack.c.b16 %v738, %v734
    %v1195 = vpack.c.b16 %v743, %v739
    %v1196 = vpack.c.b16 %v744, %v740
    %v1197 = vpack.c.b16 %v745, %v741
    %v1198 = vpack.c.b16 %v746, %v742
    %v1199 = vpack.c.b16 %v751, %v747
    %v1200 = vpack.c.b16 %v752, %v748
    %v1201 = vpack.c.b16 %v753, %v749
    %v1202 = vpack.c.b16 %v754, %v750
    %v1203 = vpack.c.b16 %v759, %v755
    %v1204 = vpack.c.b16 %v760, %v756
    %v1205 = vpack.c.b16 %v761, %v757
    %v1206 = vpack.c.b16 %v762, %v758
    %v1207 = vpack.c.b16 %v767, %v763
    %v1208 = vpack.c.b16 %v768, %v764
    %v1209 = vpack.c.b16 %v769, %v765
    %v1210 = vpack.c.b16 %v770, %v766
    %v1211 = vpack.c.b16 %v775, %v771
    %v1212 = vpack.c.b16 %v776, %v772
    %v1213 = vpack.c.b16 %v777, %v773
    %v1214 = vpack.c.b16 %v778, %v774
    %v1215 = vpack.c.b16 %v783, %v779
    %v1216 = vpack.c.b16 %v784, %v780
    %v1217 = vpack.c.b16 %v785, %v781
    %v1218 = vpack.c.b16 %v786, %v782
    %v1219 = vpack.c.b16 %v791, %v787
    %v1220 = vpack.c.b16 %v792, %v788
    %v1221 = vpack.c.b16 %v793, %v789
    %v1222 = vpack.c.b16 %v794, %v790
    %v1223 = vpack.c.b16 %v799, %v795
    %v1224 = vpack.c.b16 %v800, %v796
    %v1225 = vpack.c.b16 %v801, %v797
    %v1226 = vpack.c.b16 %v802, %v798
    %v1227 = vpack.c.b16 %v807, %v803
    %v1228 = vpack.c.b16 %v808, %v804
    %v1229 = vpack.c.b16 %v809, %v805
    %v1230 = vpack.c.b16 %v810, %v806
    %v1231 = vpack.c.b16 %v815, %v811
    %v1232 = vpack.c.b16 %v816, %v812
    %v1233 = vpack.c.b16 %v817, %v813
    %v1234 = vpack.c.b16 %v818, %v814
    %v1235 = vpack.c.b16 %v823, %v819
    %v1236 = vpack.c.b16 %v824, %v820
    %v1237 = vpack.c.b16 %v825, %v821
    %v1238 = vpack.c.b16 %v826, %v822
    %v1239 = vpack.c.b16 %v831, %v827
    %v1240 = vpack.c.b16 %v832, %v828
    %v1241 = vpack.c.b16 %v833, %v829
    %v1242 = vpack.c.b16 %v834, %v830
    %v1243 = vpack.c.b16 %v839, %v835
    %v1244 = vpack.c.b16 %v840, %v836
    %v1245 = vpack.c.b16 %v841, %v837
    %v1246 = vpack.c.b16 %v842, %v838
    %v1247 = vpack.c.b16 %v847, %v843
    %v1248 = vpack.c.b16 %v848, %v844
    %v1249 = vpack.c.b16 %v849, %v845
    %v1250 = vpack.c.b16 %v850, %v846
    %v1251 = vpack.c.b16 %v855, %v851
    %v1252 = vpack.c.b16 %v856, %v852
    %v1253 = vpack.c.b16 %v857, %v853
    %v1254 = vpack.c.b16 %v858, %v854
    %v1255 = vpack.c.b16 %v863, %v859
    %v1256 = vpack.c.b16 %v864, %v860
    %v1257 = vpack.c.b16 %v865, %v861
    %v1258 = vpack.c.b16 %v866, %v862
    %v1259 = vpack.c.b16 %v871, %v867
    %v1260 = vpack.c.b16 %v872, %v868
    %v1261 = vpack.c.b16 %v873, %v869
    %v1262 = vpack.c.b16 %v874, %v870
    %v1263 = vpack.c.b16 %v879, %v875
    %v1264 = vpack.c.b16 %v880, %v876
    %v1265 = vpack.c.b16 %v881, %v877
    %v1266 = vpack.c.b16 %v882, %v878
    %v1267 = vpack.c.b16 %v887, %v883
    %v1268 = vpack.c.b16 %v888, %v884
    %v1269 = vpack.c.b16 %v889, %v885
    %v1270 = vpack.c.b16 %v890, %v886
    %v1271 = vpack.c.b16 %v895, %v891
    %v1272 = vpack.c.b16 %v896, %v892
    %v1273 = vpack.c.b16 %v897, %v893
    %v1274 = vpack.c.b16 %v898, %v894
    %v1275 = vpack.c.b16 %v903, %v899
    %v1276 = vpack.c.b16 %v904, %v900
    %v1277 = vpack.c.b16 %v905, %v901
    %v1278 = vpack.c.b16 %v906, %v902
    %v1279 = vpack.c.b16 %v911, %v907
    %v1280 = vpack.c.b16 %v912, %v908
    %v1281 = vpack.c.b16 %v913, %v909
    %v1282 = vpack.c.b16 %v914, %v910
    %v1283 = vpack.c.b16 %v919, %v915
    %v1284 = vpack.c.b16 %v920, %v916
    %v1285 = vpack.c.b16 %v921, %v917
    %v1286 = vpack.c.b16 %v922, %v918
    %v1287 = vpack.c.b16 %v927, %v923
    %v1288 = vpack.c.b16 %v928, %v924
    %v1289 = vpack.c.b16 %v929, %v925
    %v1290 = vpack.c.b16 %v930, %v926
    %v1291 = vpack.c.b16 %v935, %v931
    %v1292 = vpack.c.b16 %v936, %v932
    %v1293 = vpack.c.b16 %v937, %v933
    %v1294 = vpack.c.b16 %v938, %v934
    %v1295 = vpack.c.b16 %v943, %v939
    %v1296 = vpack.c.b16 %v944, %v940
    %v1297 = vpack.c.b16 %v945, %v941
    %v1298 = vpack.c.b16 %v946, %v942
    %v1299 = vpack.c.b16 %v951, %v947
    %v1300 = vpack.c.b16 %v952, %v948
    %v1301 = vpack.c.b16 %v953, %v949
    %v1302 = vpack.c.b16 %v954, %v950
    %v1303 = vpack.c.b16 %v959, %v955
    %v1304 = vpack.c.b16 %v960, %v956
    %v1305 = vpack.c.b16 %v961, %v957
    %v1306 = vpack.c.b16 %v962, %v958
    %v1307 = vpack.c.b16 %v967, %v963
    %v1308 = vpack.c.b16 %v968, %v964
    %v1309 = vpack.c.b16 %v969, %v965
    %v1310 = vpack.c.b16 %v970, %v966
    %v1311 = vpack.c.b16 %v975, %v971
    %v1312 = vpack.c.b16 %v976, %v972
    %v1313 = vpack.c.b16 %v977, %v973
    %v1314 = vpack.c.b16 %v978, %v974
    %v1315 = vpack.c.b16 %v983, %v979
    %v1316 = vpack.c.b16 %v984, %v980
    %v1317 = vpack.c.b16 %v985, %v981
    %v1318 = vpack.c.b16 %v986, %v982
    %v1319 = vpack.c.b16 %v991, %v987
    %v1320 = vpack.c.b16 %v992, %v988
    %v1321 = vpack.c.b16 %v993, %v989
    %v1322 = vpack.c.b16 %v994, %v990
    %v1323 = vpack.c.b16 %v999, %v995
    %v1324 = vpack.c.b16 %v1000, %v996
    %v1325 = vpack.c.b16 %v1001, %v997
    %v1326 = vpack.c.b16 %v1002, %v998
    %v1327 = vpack.c.b16 %v1007, %v1003
    %v1328 = vpack.c.b16 %v1008, %v1004
    %v1329 = vpack.c.b16 %v1009, %v1005
    %v1330 = vpack.c.b16 %v1010, %v1006
    %v1331 = vpack.c.b16 %v1015, %v1011
    %v1332 = vpack.c.b16 %v1016, %v1012
    %v1333 = vpack.c.b16 %v1017, %v1013
    %v1334 = vpack.c.b16 %v1018, %v1014
    %v1335 = vpack.c.b16 %v1023, %v1019
    %v1336 = vpack.c.b16 %v1024, %v1020
    %v1337 = vpack.c.b16 %v1025, %v1021
    %v1338 = vpack.c.b16 %v1026, %v1022
    %v1339 = vpack.c.b16 %v1031, %v1027
    %v1340 = vpack.c.b16 %v1032, %v1028
    %v1341 = vpack.c.b16 %v1033, %v1029
    %v1342 = vpack.c.b16 %v1034, %v1030
    %v1343 = vpack.c.b16 %v1039, %v1035
    %v1344 = vpack.c.b16 %v1040, %v1036
    %v1345 = vpack.c.b16 %v1041, %v1037
    %v1346 = vpack.c.b16 %v1042, %v1038
    %v1347 = vpack.c.b16 %v1047, %v1043
    %v1348 = vpack.c.b16 %v1048, %v1044
    %v1349 = vpack.c.b16 %v1049, %v1045
    %v1350 = vpack.c.b16 %v1050, %v1046
    %v1351 = vpack.c.b16 %v1055, %v1051
    %v1352 = vpack.c.b16 %v1056, %v1052
    %v1353 = vpack.c.b16 %v1057, %v1053
    %v1354 = vpack.c.b16 %v1058, %v1054
    %v1355 = vpack.c.b16 %v1063, %v1059
    %v1356 = vpack.c.b16 %v1064, %v1060
    %v1357 = vpack.c.b16 %v1065, %v1061
    %v1358 = vpack.c.b16 %v1066, %v1062
    %v1359 = vpack.c.b16 %v1071, %v1067
    %v1360 = vpack.c.b16 %v1072, %v1068
    %v1361 = vpack.c.b16 %v1073, %v1069
    %v1362 = vpack.c.b16 %v1074, %v1070
    %v1363 = vpack.c.b16 %v1079, %v1075
    %v1364 = vpack.c.b16 %v1080, %v1076
    %v1365 = vpack.c.b16 %v1081, %v1077
    %v1366 = vpack.c.b16 %v1082, %v1078
    %v1367 = vpack.c.b16 %v1087, %v1083
    %v1368 = vpack.c.b16 %v1088, %v1084
    %v1369 = vpack.c.b16 %v1089, %v1085
    %v1370 = vpack.c.b16 %v1090, %v1086
    %v1371 = vpack.c.b16 %v1095, %v1091
    %v1372 = vpack.c.b16 %v1096, %v1092
    %v1373 = vpack.c.b16 %v1097, %v1093
    %v1374 = vpack.c.b16 %v1098, %v1094
    %v1375 = vpack.c.b16 %v1103, %v1099
    %v1376 = vpack.c.b16 %v1104, %v1100
    %v1377 = vpack.c.b16 %v1105, %v1101
    %v1378 = vpack.c.b16 %v1106, %v1102
    %v1379 = vpack.c.b16 %v1111, %v1107
    %v1380 = vpack.c.b16 %v1112, %v1108
    %v1381 = vpack.c.b16 %v1113, %v1109
    %v1382 = vpack.c.b16 %v1114, %v1110
    %v1383 = vpack.c.b16 %v1119, %v1115
    %v1384 = vpack.c.b16 %v1120, %v1116
    %v1385 = vpack.c.b16 %v1121, %v1117
    %v1386 = vpack.c.b16 %v1122, %v1118
    %v1387 = vpack.c.b16 %v1127, %v1123
    %v1388 = vpack.c.b16 %v1128, %v1124
    %v1389 = vpack.c.b16 %v1129, %v1125
    %v1390 = vpack.c.b16 %v1130, %v1126
    %v1391 = vpack.c.b16 %v1135, %v1131
    %v1392 = vpack.c.b16 %v1136, %v1132
    %v1393 = vpack.c.b16 %v1137, %v1133
    %v1394 = vpack.c.b16 %v1138, %v1134
    %1651 = vmatprep.subr.bf16.mxu0 %v1168
    %1652 = vmatpush1.bf16.msra.mxu0 %v1167
    %1653 = vmatprep.subr.bf16.mxu0 %v1164
    %1654 = vmatpush1.bf16.msra.mxu0 %v1163
    %1655 = vmatprep.subr.bf16.mxu0 %v1160
    %1656 = vmatpush1.bf16.msra.mxu0 %v1159
    %1657 = vmatprep.subr.bf16.mxu0 %v1156
    %1658 = vmatpush1.bf16.msra.mxu0 %v1155
    %1659 = vmatprep.subr.bf16.mxu0 %v1152
    %1660 = vmatpush1.bf16.msra.mxu0 %v1151
    %1661 = vmatprep.subr.bf16.mxu0 %v1148
    %1662 = vmatpush1.bf16.msra.mxu0 %v1147
    %1663 = vmatprep.subr.bf16.mxu0 %v1144
    %1664 = vmatpush1.bf16.msra.mxu0 %v1143
    %1665 = vmatprep.subr.bf16.mxu0 %v1140
    %1666 = vmatpush1.bf16.msra.mxu0 %v1139
    %1667 = vmatprep.subr.bf16.mxu0 %v1200
    %1668 = vmatpush2.bf16.msra.mxu0 %v1199
    %1669 = vmatprep.subr.bf16.mxu0 %v1196
    %1670 = vmatpush2.bf16.msra.mxu0 %v1195
    %1671 = vmatprep.subr.bf16.mxu0 %v1192
    %1672 = vmatpush2.bf16.msra.mxu0 %v1191
    %1673 = vmatprep.subr.bf16.mxu0 %v1188
    %1674 = vmatpush2.bf16.msra.mxu0 %v1187
    %1675 = vmatprep.subr.bf16.mxu0 %v1184
    %1676 = vmatpush2.bf16.msra.mxu0 %v1183
    %1677 = vmatprep.subr.bf16.mxu0 %v1180
    %1678 = vmatpush2.bf16.msra.mxu0 %v1179
    %1679 = vmatprep.subr.bf16.mxu0 %v1176
    %1680 = vmatpush2.bf16.msra.mxu0 %v1175
    %1681 = vmatprep.subr.bf16.mxu0 %v1172
    %1682 = vmatpush2.bf16.msra.mxu0 %v1171
    %1683 = vmatprep.mubr.bf16.mxu0 %v356
    %1684 = vmatmul.mubr.bf16.gmra.mxu0 %v355
    %v1685 = vpop.f32.mrf.mxu0
    %v1686 = vadd.f32 0.0, %v1685
    %v1687 = vpop.f32.mrf.mxu0
    %v1688 = vadd.f32 0.0, %v1687
    %v1689 = vpop.f32.mrf.mxu0
    %v1690 = vadd.f32 0.0, %v1689
    %v1691 = vpop.f32.mrf.mxu0
    %v1692 = vadd.f32 0.0, %v1691
    %1693 = vdwg.mxu0
    %1694 = vmatprep.subr.bf16.mxu0 %v1232
    %1695 = vmatpush1.bf16.msra.mxu0 %v1231
    %1696 = vmatprep.subr.bf16.mxu0 %v1228
    %1697 = vmatpush1.bf16.msra.mxu0 %v1227
    %1698 = vmatprep.subr.bf16.mxu0 %v1224
    %1699 = vmatpush1.bf16.msra.mxu0 %v1223
    %1700 = vmatprep.subr.bf16.mxu0 %v1220
    %1701 = vmatpush1.bf16.msra.mxu0 %v1219
    %1702 = vmatprep.subr.bf16.mxu0 %v1216
    %1703 = vmatpush1.bf16.msra.mxu0 %v1215
    %1704 = vmatprep.subr.bf16.mxu0 %v1212
    %1705 = vmatpush1.bf16.msra.mxu0 %v1211
    %1706 = vmatprep.subr.bf16.mxu0 %v1208
    %1707 = vmatpush1.bf16.msra.mxu0 %v1207
    %1708 = vmatprep.subr.bf16.mxu0 %v1204
    %1709 = vmatpush1.bf16.msra.mxu0 %v1203
    %1710 = vmatprep.subr.bf16.mxu0 %v1264
    %1711 = vmatpush2.bf16.msra.mxu0 %v1263
    %1712 = vmatprep.subr.bf16.mxu0 %v1260
    %1713 = vmatpush2.bf16.msra.mxu0 %v1259
    %1714 = vmatprep.subr.bf16.mxu0 %v1256
    %1715 = vmatpush2.bf16.msra.mxu0 %v1255
    %1716 = vmatprep.subr.bf16.mxu0 %v1252
    %1717 = vmatpush2.bf16.msra.mxu0 %v1251
    %1718 = vmatprep.subr.bf16.mxu0 %v1248
    %1719 = vmatpush2.bf16.msra.mxu0 %v1247
    %1720 = vmatprep.subr.bf16.mxu0 %v1244
    %1721 = vmatpush2.bf16.msra.mxu0 %v1243
    %1722 = vmatprep.subr.bf16.mxu0 %v1240
    %1723 = vmatpush2.bf16.msra.mxu0 %v1239
    %1724 = vmatprep.subr.bf16.mxu0 %v1236
    %1725 = vmatpush2.bf16.msra.mxu0 %v1235
    %1726 = vmatprep.mubr.bf16.mxu0 %v358
    %1727 = vmatmul.mubr.bf16.gmra.mxu0 %v357
    %v1728 = vpop.f32.mrf.mxu0
    %v1729 = vadd.f32 %v1686, %v1728
    %v1730 = vpop.f32.mrf.mxu0
    %v1731 = vadd.f32 %v1688, %v1730
    %v1732 = vpop.f32.mrf.mxu0
    %v1733 = vadd.f32 %v1690, %v1732
    %v1734 = vpop.f32.mrf.mxu0
    %v1735 = vadd.f32 %v1692, %v1734
    %1736 = vdwg.mxu0
    %1737 = vmatprep.subr.bf16.mxu0 %v1296
    %1738 = vmatpush1.bf16.msra.mxu0 %v1295
    %1739 = vmatprep.subr.bf16.mxu0 %v1292
    %1740 = vmatpush1.bf16.msra.mxu0 %v1291
    %1741 = vmatprep.subr.bf16.mxu0 %v1288
    %1742 = vmatpush1.bf16.msra.mxu0 %v1287
    %1743 = vmatprep.subr.bf16.mxu0 %v1284
    %1744 = vmatpush1.bf16.msra.mxu0 %v1283
    %1745 = vmatprep.subr.bf16.mxu0 %v1280
    %1746 = vmatpush1.bf16.msra.mxu0 %v1279
    %1747 = vmatprep.subr.bf16.mxu0 %v1276
    %1748 = vmatpush1.bf16.msra.mxu0 %v1275
    %1749 = vmatprep.subr.bf16.mxu0 %v1272
    %1750 = vmatpush1.bf16.msra.mxu0 %v1271
    %1751 = vmatprep.subr.bf16.mxu0 %v1268
    %1752 = vmatpush1.bf16.msra.mxu0 %v1267
    %1753 = vmatprep.subr.bf16.mxu0 %v1328
    %1754 = vmatpush2.bf16.msra.mxu0 %v1327
    %1755 = vmatprep.subr.bf16.mxu0 %v1324
    %1756 = vmatpush2.bf16.msra.mxu0 %v1323
    %1757 = vmatprep.subr.bf16.mxu0 %v1320
    %1758 = vmatpush2.bf16.msra.mxu0 %v1319
    %1759 = vmatprep.subr.bf16.mxu0 %v1316
    %1760 = vmatpush2.bf16.msra.mxu0 %v1315
    %1761 = vmatprep.subr.bf16.mxu0 %v1312
    %1762 = vmatpush2.bf16.msra.mxu0 %v1311
    %1763 = vmatprep.subr.bf16.mxu0 %v1308
    %1764 = vmatpush2.bf16.msra.mxu0 %v1307
    %1765 = vmatprep.subr.bf16.mxu0 %v1304
    %1766 = vmatpush2.bf16.msra.mxu0 %v1303
    %1767 = vmatprep.subr.bf16.mxu0 %v1300
    %1768 = vmatpush2.bf16.msra.mxu0 %v1299
    %1769 = vmatprep.mubr.bf16.mxu0 %v360
    %1770 = vmatmul.mubr.bf16.gmra.mxu0 %v359
    %v1771 = vpop.f32.mrf.mxu0
    %v1772 = vadd.f32 %v1729, %v1771
    %v1773 = vpop.f32.mrf.mxu0
    %v1774 = vadd.f32 %v1731, %v1773
    %v1775 = vpop.f32.mrf.mxu0
    %v1776 = vadd.f32 %v1733, %v1775
    %v1777 = vpop.f32.mrf.mxu0
    %v1778 = vadd.f32 %v1735, %v1777
    %1779 = vdwg.mxu0
    %1780 = vmatprep.subr.bf16.mxu0 %v1360
    %1781 = vmatpush1.bf16.msra.mxu0 %v1359
    %1782 = vmatprep.subr.bf16.mxu0 %v1356
    %1783 = vmatpush1.bf16.msra.mxu0 %v1355
    %1784 = vmatprep.subr.bf16.mxu0 %v1352
    %1785 = vmatpush1.bf16.msra.mxu0 %v1351
    %1786 = vmatprep.subr.bf16.mxu0 %v1348
    %1787 = vmatpush1.bf16.msra.mxu0 %v1347
    %1788 = vmatprep.subr.bf16.mxu0 %v1344
    %1789 = vmatpush1.bf16.msra.mxu0 %v1343
    %1790 = vmatprep.subr.bf16.mxu0 %v1340
    %1791 = vmatpush1.bf16.msra.mxu0 %v1339
    %1792 = vmatprep.subr.bf16.mxu0 %v1336
    %1793 = vmatpush1.bf16.msra.mxu0 %v1335
    %1794 = vmatprep.subr.bf16.mxu0 %v1332
    %1795 = vmatpush1.bf16.msra.mxu0 %v1331
    %1796 = vmatprep.subr.bf16.mxu0 %v1392
    %1797 = vmatpush2.bf16.msra.mxu0 %v1391
    %1798 = vmatprep.subr.bf16.mxu0 %v1388
    %1799 = vmatpush2.bf16.msra.mxu0 %v1387
    %1800 = vmatprep.subr.bf16.mxu0 %v1384
    %1801 = vmatpush2.bf16.msra.mxu0 %v1383
    %1802 = vmatprep.subr.bf16.mxu0 %v1380
    %1803 = vmatpush2.bf16.msra.mxu0 %v1379
    %1804 = vmatprep.subr.bf16.mxu0 %v1376
    %1805 = vmatpush2.bf16.msra.mxu0 %v1375
    %1806 = vmatprep.subr.bf16.mxu0 %v1372
    %1807 = vmatpush2.bf16.msra.mxu0 %v1371
    %1808 = vmatprep.subr.bf16.mxu0 %v1368
    %1809 = vmatpush2.bf16.msra.mxu0 %v1367
    %1810 = vmatprep.subr.bf16.mxu0 %v1364
    %1811 = vmatpush2.bf16.msra.mxu0 %v1363
    %1812 = vmatprep.mubr.bf16.mxu0 %v362
    %1813 = vmatmul.mubr.bf16.gmra.mxu0 %v361
    %v1814 = vpop.f32.mrf.mxu0
    %v1815 = vadd.f32 %v1772, %v1814
    %v1816 = vpop.f32.mrf.mxu0
    %v1817 = vadd.f32 %v1774, %v1816
    %v1818 = vpop.f32.mrf.mxu0
    %v1819 = vadd.f32 %v1776, %v1818
    %v1820 = vpop.f32.mrf.mxu0
    %v1821 = vadd.f32 %v1778, %v1820
    %1822 = vdwg.mxu0
    %1823 = vmatprep.subr.bf16.mxu0 %v1170
    %1824 = vmatpush1.bf16.msra.mxu0 %v1169
    %1825 = vmatprep.subr.bf16.mxu0 %v1166
    %1826 = vmatpush1.bf16.msra.mxu0 %v1165
    %1827 = vmatprep.subr.bf16.mxu0 %v1162
    %1828 = vmatpush1.bf16.msra.mxu0 %v1161
    %1829 = vmatprep.subr.bf16.mxu0 %v1158
    %1830 = vmatpush1.bf16.msra.mxu0 %v1157
    %1831 = vmatprep.subr.bf16.mxu0 %v1154
    %1832 = vmatpush1.bf16.msra.mxu0 %v1153
    %1833 = vmatprep.subr.bf16.mxu0 %v1150
    %1834 = vmatpush1.bf16.msra.mxu0 %v1149
    %1835 = vmatprep.subr.bf16.mxu0 %v1146
    %1836 = vmatpush1.bf16.msra.mxu0 %v1145
    %1837 = vmatprep.subr.bf16.mxu0 %v1142
    %1838 = vmatpush1.bf16.msra.mxu0 %v1141
    %1839 = vmatprep.subr.bf16.mxu0 %v1202
    %1840 = vmatpush2.bf16.msra.mxu0 %v1201
    %1841 = vmatprep.subr.bf16.mxu0 %v1198
    %1842 = vmatpush2.bf16.msra.mxu0 %v1197
    %1843 = vmatprep.subr.bf16.mxu0 %v1194
    %1844 = vmatpush2.bf16.msra.mxu0 %v1193
    %1845 = vmatprep.subr.bf16.mxu0 %v1190
    %1846 = vmatpush2.bf16.msra.mxu0 %v1189
    %1847 = vmatprep.subr.bf16.mxu0 %v1186
    %1848 = vmatpush2.bf16.msra.mxu0 %v1185
    %1849 = vmatprep.subr.bf16.mxu0 %v1182
    %1850 = vmatpush2.bf16.msra.mxu0 %v1181
    %1851 = vmatprep.subr.bf16.mxu0 %v1178
    %1852 = vmatpush2.bf16.msra.mxu0 %v1177
    %1853 = vmatprep.subr.bf16.mxu0 %v1174
    %1854 = vmatpush2.bf16.msra.mxu0 %v1173
    %1855 = vmatprep.mubr.bf16.mxu0 %v356
    %1856 = vmatmul.mubr.bf16.gmra.mxu0 %v355
    %v1857 = vpop.f32.mrf.mxu0
    %v1858 = vadd.f32 0.0, %v1857
    %v1859 = vpop.f32.mrf.mxu0
    %v1860 = vadd.f32 0.0, %v1859
    %v1861 = vpop.f32.mrf.mxu0
    %v1862 = vadd.f32 0.0, %v1861
    %v1863 = vpop.f32.mrf.mxu0
    %v1864 = vadd.f32 0.0, %v1863
    %1865 = vdwg.mxu0
    %1866 = vmatprep.subr.bf16.mxu0 %v1234
    %1867 = vmatpush1.bf16.msra.mxu0 %v1233
    %1868 = vmatprep.subr.bf16.mxu0 %v1230
    %1869 = vmatpush1.bf16.msra.mxu0 %v1229
    %1870 = vmatprep.subr.bf16.mxu0 %v1226
    %1871 = vmatpush1.bf16.msra.mxu0 %v1225
    %1872 = vmatprep.subr.bf16.mxu0 %v1222
    %1873 = vmatpush1.bf16.msra.mxu0 %v1221
    %1874 = vmatprep.subr.bf16.mxu0 %v1218
    %1875 = vmatpush1.bf16.msra.mxu0 %v1217
    %1876 = vmatprep.subr.bf16.mxu0 %v1214
    %1877 = vmatpush1.bf16.msra.mxu0 %v1213
    %1878 = vmatprep.subr.bf16.mxu0 %v1210
    %1879 = vmatpush1.bf16.msra.mxu0 %v1209
    %1880 = vmatprep.subr.bf16.mxu0 %v1206
    %1881 = vmatpush1.bf16.msra.mxu0 %v1205
    %1882 = vmatprep.subr.bf16.mxu0 %v1266
    %1883 = vmatpush2.bf16.msra.mxu0 %v1265
    %1884 = vmatprep.subr.bf16.mxu0 %v1262
    %1885 = vmatpush2.bf16.msra.mxu0 %v1261
    %1886 = vmatprep.subr.bf16.mxu0 %v1258
    %1887 = vmatpush2.bf16.msra.mxu0 %v1257
    %1888 = vmatprep.subr.bf16.mxu0 %v1254
    %1889 = vmatpush2.bf16.msra.mxu0 %v1253
    %1890 = vmatprep.subr.bf16.mxu0 %v1250
    %1891 = vmatpush2.bf16.msra.mxu0 %v1249
    %1892 = vmatprep.subr.bf16.mxu0 %v1246
    %1893 = vmatpush2.bf16.msra.mxu0 %v1245
    %1894 = vmatprep.subr.bf16.mxu0 %v1242
    %1895 = vmatpush2.bf16.msra.mxu0 %v1241
    %1896 = vmatprep.subr.bf16.mxu0 %v1238
    %1897 = vmatpush2.bf16.msra.mxu0 %v1237
    %1898 = vmatprep.mubr.bf16.mxu0 %v358
    %1899 = vmatmul.mubr.bf16.gmra.mxu0 %v357
    %v1900 = vpop.f32.mrf.mxu0
    %v1901 = vadd.f32 %v1858, %v1900
    %v1902 = vpop.f32.mrf.mxu0
    %v1903 = vadd.f32 %v1860, %v1902
    %v1904 = vpop.f32.mrf.mxu0
    %v1905 = vadd.f32 %v1862, %v1904
    %v1906 = vpop.f32.mrf.mxu0
    %v1907 = vadd.f32 %v1864, %v1906
    %1908 = vdwg.mxu0
    %1909 = vmatprep.subr.bf16.mxu0 %v1298
    %1910 = vmatpush1.bf16.msra.mxu0 %v1297
    %1911 = vmatprep.subr.bf16.mxu0 %v1294
    %1912 = vmatpush1.bf16.msra.mxu0 %v1293
    %1913 = vmatprep.subr.bf16.mxu0 %v1290
    %1914 = vmatpush1.bf16.msra.mxu0 %v1289
    %1915 = vmatprep.subr.bf16.mxu0 %v1286
    %1916 = vmatpush1.bf16.msra.mxu0 %v1285
    %1917 = vmatprep.subr.bf16.mxu0 %v1282
    %1918 = vmatpush1.bf16.msra.mxu0 %v1281
    %1919 = vmatprep.subr.bf16.mxu0 %v1278
    %1920 = vmatpush1.bf16.msra.mxu0 %v1277
    %1921 = vmatprep.subr.bf16.mxu0 %v1274
    %1922 = vmatpush1.bf16.msra.mxu0 %v1273
    %1923 = vmatprep.subr.bf16.mxu0 %v1270
    %1924 = vmatpush1.bf16.msra.mxu0 %v1269
    %1925 = vmatprep.subr.bf16.mxu0 %v1330
    %1926 = vmatpush2.bf16.msra.mxu0 %v1329
    %1927 = vmatprep.subr.bf16.mxu0 %v1326
    %1928 = vmatpush2.bf16.msra.mxu0 %v1325
    %1929 = vmatprep.subr.bf16.mxu0 %v1322
    %1930 = vmatpush2.bf16.msra.mxu0 %v1321
    %1931 = vmatprep.subr.bf16.mxu0 %v1318
    %1932 = vmatpush2.bf16.msra.mxu0 %v1317
    %1933 = vmatprep.subr.bf16.mxu0 %v1314
    %1934 = vmatpush2.bf16.msra.mxu0 %v1313
    %1935 = vmatprep.subr.bf16.mxu0 %v1310
    %1936 = vmatpush2.bf16.msra.mxu0 %v1309
    %1937 = vmatprep.subr.bf16.mxu0 %v1306
    %1938 = vmatpush2.bf16.msra.mxu0 %v1305
    %1939 = vmatprep.subr.bf16.mxu0 %v1302
    %1940 = vmatpush2.bf16.msra.mxu0 %v1301
    %1941 = vmatprep.mubr.bf16.mxu0 %v360
    %1942 = vmatmul.mubr.bf16.gmra.mxu0 %v359
    %v1943 = vpop.f32.mrf.mxu0
    %v1944 = vadd.f32 %v1901, %v1943
    %v1945 = vpop.f32.mrf.mxu0
    %v1946 = vadd.f32 %v1903, %v1945
    %v1947 = vpop.f32.mrf.mxu0
    %v1948 = vadd.f32 %v1905, %v1947
    %v1949 = vpop.f32.mrf.mxu0
    %v1950 = vadd.f32 %v1907, %v1949
    %1951 = vdwg.mxu0
    %1952 = vmatprep.subr.bf16.mxu0 %v1362
    %1953 = vmatpush1.bf16.msra.mxu0 %v1361
    %1954 = vmatprep.subr.bf16.mxu0 %v1358
    %1955 = vmatpush1.bf16.msra.mxu0 %v1357
    %1956 = vmatprep.subr.bf16.mxu0 %v1354
    %1957 = vmatpush1.bf16.msra.mxu0 %v1353
    %1958 = vmatprep.subr.bf16.mxu0 %v1350
    %1959 = vmatpush1.bf16.msra.mxu0 %v1349
    %1960 = vmatprep.subr.bf16.mxu0 %v1346
    %1961 = vmatpush1.bf16.msra.mxu0 %v1345
    %1962 = vmatprep.subr.bf16.mxu0 %v1342
    %1963 = vmatpush1.bf16.msra.mxu0 %v1341
    %1964 = vmatprep.subr.bf16.mxu0 %v1338
    %1965 = vmatpush1.bf16.msra.mxu0 %v1337
    %1966 = vmatprep.subr.bf16.mxu0 %v1334
    %1967 = vmatpush1.bf16.msra.mxu0 %v1333
    %1968 = vmatprep.subr.bf16.mxu0 %v1394
    %1969 = vmatpush2.bf16.msra.mxu0 %v1393
    %1970 = vmatprep.subr.bf16.mxu0 %v1390
    %1971 = vmatpush2.bf16.msra.mxu0 %v1389
    %1972 = vmatprep.subr.bf16.mxu0 %v1386
    %1973 = vmatpush2.bf16.msra.mxu0 %v1385
    %1974 = vmatprep.subr.bf16.mxu0 %v1382
    %1975 = vmatpush2.bf16.msra.mxu0 %v1381
    %1976 = vmatprep.subr.bf16.mxu0 %v1378
    %1977 = vmatpush2.bf16.msra.mxu0 %v1377
    %1978 = vmatprep.subr.bf16.mxu0 %v1374
    %1979 = vmatpush2.bf16.msra.mxu0 %v1373
    %1980 = vmatprep.subr.bf16.mxu0 %v1370
    %1981 = vmatpush2.bf16.msra.mxu0 %v1369
    %1982 = vmatprep.subr.bf16.mxu0 %v1366
    %1983 = vmatpush2.bf16.msra.mxu0 %v1365
    %1984 = vmatprep.mubr.bf16.mxu0 %v362
    %1985 = vmatmul.mubr.bf16.gmra.mxu0 %v361
    %v1986 = vpop.f32.mrf.mxu0
    %v1987 = vadd.f32 %v1944, %v1986
    %v1988 = vpop.f32.mrf.mxu0
    %v1989 = vadd.f32 %v1946, %v1988
    %v1990 = vpop.f32.mrf.mxu0
    %v1991 = vadd.f32 %v1948, %v1990
    %v1992 = vpop.f32.mrf.mxu0
    %v1993 = vadd.f32 %v1950, %v1992
    %1994 = vdwg.mxu0
    %v1995 = vadd.f32 %v55, %v1815
    %v1996 = vadd.f32 %v56, %v1817
    %v1997 = vadd.f32 %v57, %v1987
    %v1998 = vadd.f32 %v58, %v1989
    %v1999 = vadd.f32 %v59, %v1819
    %v2000 = vadd.f32 %v60, %v1821
    %v2001 = vadd.f32 %v61, %v1991
    %v2002 = vadd.f32 %v62, %v1993
    %2003 = vst [vmem:[#allocation2] sm:$0xff] %v1995
    %2004 = vst [vmem:[#allocation2 + $0x8] sm:$0xff] %v1996
    %2005 = vst [vmem:[#allocation2 + $0x10] sm:$0xff] %v1997
    %2006 = vst [vmem:[#allocation2 + $0x18] sm:$0xff] %v1998
    %2007 = vst [vmem:[#allocation2 + $0x20] sm:$0xff] %v1999
    %2008 = vst [vmem:[#allocation2 + $0x28] sm:$0xff] %v2000
    %2009 = vst [vmem:[#allocation2 + $0x30] sm:$0xff] %v2001
    %2010 = vst [vmem:[#allocation2 + $0x38] sm:$0xff] %v2002
    // Predicated region
    $region26: #{forward.1} parent=1 // pred_check
      %p2011 = pneg %p42
    $region27: #{forward.1} parent=1 // pred_check_branch
      %2013 = sbr.rel (%p2011) target = $region29
    $region28: #{forward.1} parent=1 // pred_region
      %v2014 = vld [vmem:[#allocation2] sm:$0xff]
      %v2015 = vld [vmem:[#allocation2 + $0x8] sm:$0xff]
      %v2016 = vld [vmem:[#allocation2 + $0x10] sm:$0xff]
      %v2017 = vld [vmem:[#allocation2 + $0x18] sm:$0xff]
      %v2018 = vld [vmem:[#allocation2 + $0x20] sm:$0xff]
      %v2019 = vld [vmem:[#allocation2 + $0x28] sm:$0xff]
      %v2020 = vld [vmem:[#allocation2 + $0x30] sm:$0xff]
      %v2021 = vld [vmem:[#allocation2 + $0x38] sm:$0xff]
      %v2022 = vmul.f32 %v2014, %v2014
      %v2023 = vmul.f32 %v2015, %v2015
      %v2024 = vmul.f32 %v2016, %v2016
      %v2025 = vmul.f32 %v2017, %v2017
      %v2026 = vmul.f32 %v2018, %v2018
      %v2027 = vmul.f32 %v2019, %v2019
      %v2028 = vmul.f32 %v2020, %v2020
      %v2029 = vmul.f32 %v2021, %v2021
      %v2030 = vadd.f32 %v2022, %v2023
      %v2031 = vadd.f32 %v2030, %v2024
      %v2032 = vadd.f32 %v2031, %v2025
      %2033 = vadd.xlane.f32.xlu0 %v2032
      %v2034 = vpop.xlane.xlu0 %2033
      %v2035 = vadd.f32 %v2026, %v2027
      %v2036 = vadd.f32 %v2035, %v2028
      %v2037 = vadd.f32 %v2036, %v2029
      %2038 = vadd.xlane.f32.xlu0 %v2037
      %v2039 = vpop.xlane.xlu0 %2038
      %v2040 = vmax.f32 %v2034, 1e-24
      %v2041 = vmax.f32 %v2039, 1e-24
      %v2042 = vrsqrt.pop %v2040
      %v2043 = vrsqrt.pop %v2041
      %v2044 = vmul.f32 %v2014, %v2042
      %v2045 = vmul.f32 %v2015, %v2042
      %v2046 = vmul.f32 %v2016, %v2042
      %v2047 = vmul.f32 %v2017, %v2042
      %v2048 = vmul.f32 %v2018, %v2043
      %v2049 = vmul.f32 %v2019, %v2043
      %v2050 = vmul.f32 %v2020, %v2043
      %v2051 = vmul.f32 %v2021, %v2043
      %v2052 = vpack.c.bf16 %v2048, %v2044
      %v2053 = vpack.c.bf16 %v2049, %v2045
      %v2054 = vpack.c.bf16 %v2050, %v2046
      %v2055 = vpack.c.bf16 %v2051, %v2047
      %v2056 = vld [vmem:[#allocation5] sm:$0xff]
      %v2057 = vld [vmem:[#allocation5 + $0x8] sm:$0xff]
      %v2058 = vld [vmem:[#allocation5 + $0x10] sm:$0xff]
      %v2059 = vld [vmem:[#allocation5 + $0x18] sm:$0xff]
      %v2060 = vld [vmem:[#allocation5 + $0x20] sm:$0xff]
      %v2061 = vld [vmem:[#allocation5 + $0x28] sm:$0xff]
      %v2062 = vld [vmem:[#allocation5 + $0x30] sm:$0xff]
      %v2063 = vld [vmem:[#allocation5 + $0x38] sm:$0xff]
      %v2064 = vld [vmem:[#allocation5 + $0x40] sm:$0xff]
      %v2065 = vld [vmem:[#allocation5 + $0x48] sm:$0xff]
      %v2066 = vld [vmem:[#allocation5 + $0x50] sm:$0xff]
      %v2067 = vld [vmem:[#allocation5 + $0x58] sm:$0xff]
      %v2068 = vld [vmem:[#allocation5 + $0x60] sm:$0xff]
      %v2069 = vld [vmem:[#allocation5 + $0x68] sm:$0xff]
      %v2070 = vld [vmem:[#allocation5 + $0x70] sm:$0xff]
      %v2071 = vld [vmem:[#allocation5 + $0x78] sm:$0xff]
      %v2072 = vld [vmem:[#allocation5 + $0x80] sm:$0xff]
      %v2073 = vld [vmem:[#allocation5 + $0x88] sm:$0xff]
      %v2074 = vld [vmem:[#allocation5 + $0x90] sm:$0xff]
      %v2075 = vld [vmem:[#allocation5 + $0x98] sm:$0xff]
      %v2076 = vld [vmem:[#allocation5 + $0xa0] sm:$0xff]
      %v2077 = vld [vmem:[#allocation5 + $0xa8] sm:$0xff]
      %v2078 = vld [vmem:[#allocation5 + $0xb0] sm:$0xff]
      %v2079 = vld [vmem:[#allocation5 + $0xb8] sm:$0xff]
      %v2080 = vld [vmem:[#allocation5 + $0xc0] sm:$0xff]
      %v2081 = vld [vmem:[#allocation5 + $0xc8] sm:$0xff]
      %v2082 = vld [vmem:[#allocation5 + $0xd0] sm:$0xff]
      %v2083 = vld [vmem:[#allocation5 + $0xd8] sm:$0xff]
      %v2084 = vld [vmem:[#allocation5 + $0xe0] sm:$0xff]
      %v2085 = vld [vmem:[#allocation5 + $0xe8] sm:$0xff]
      %v2086 = vld [vmem:[#allocation5 + $0xf0] sm:$0xff]
      %v2087 = vld [vmem:[#allocation5 + $0xf8] sm:$0xff]
      %v2088 = vld [vmem:[#allocation5 + $0x100] sm:$0xff]
      %v2089 = vld [vmem:[#allocation5 + $0x108] sm:$0xff]
      %v2090 = vld [vmem:[#allocation5 + $0x110] sm:$0xff]
      %v2091 = vld [vmem:[#allocation5 + $0x118] sm:$0xff]
      %v2092 = vld [vmem:[#allocation5 + $0x120] sm:$0xff]
      %v2093 = vld [vmem:[#allocation5 + $0x128] sm:$0xff]
      %v2094 = vld [vmem:[#allocation5 + $0x130] sm:$0xff]
      %v2095 = vld [vmem:[#allocation5 + $0x138] sm:$0xff]
      %v2096 = vld [vmem:[#allocation5 + $0x140] sm:$0xff]
      %v2097 = vld [vmem:[#allocation5 + $0x148] sm:$0xff]
      %v2098 = vld [vmem:[#allocation5 + $0x150] sm:$0xff]
      %v2099 = vld [vmem:[#allocation5 + $0x158] sm:$0xff]
      %v2100 = vld [vmem:[#allocation5 + $0x160] sm:$0xff]
      %v2101 = vld [vmem:[#allocation5 + $0x168] sm:$0xff]
      %v2102 = vld [vmem:[#allocation5 + $0x170] sm:$0xff]
      %v2103 = vld [vmem:[#allocation5 + $0x178] sm:$0xff]
      %v2104 = vld [vmem:[#allocation5 + $0x180] sm:$0xff]
      %v2105 = vld [vmem:[#allocation5 + $0x188] sm:$0xff]
      %v2106 = vld [vmem:[#allocation5 + $0x190] sm:$0xff]
      %v2107 = vld [vmem:[#allocation5 + $0x198] sm:$0xff]
      %v2108 = vld [vmem:[#allocation5 + $0x1a0] sm:$0xff]
      %v2109 = vld [vmem:[#allocation5 + $0x1a8] sm:$0xff]
      %v2110 = vld [vmem:[#allocation5 + $0x1b0] sm:$0xff]
      %v2111 = vld [vmem:[#allocation5 + $0x1b8] sm:$0xff]
      %v2112 = vld [vmem:[#allocation5 + $0x1c0] sm:$0xff]
      %v2113 = vld [vmem:[#allocation5 + $0x1c8] sm:$0xff]
      %v2114 = vld [vmem:[#allocation5 + $0x1d0] sm:$0xff]
      %v2115 = vld [vmem:[#allocation5 + $0x1d8] sm:$0xff]
      %v2116 = vld [vmem:[#allocation5 + $0x1e0] sm:$0xff]
      %v2117 = vld [vmem:[#allocation5 + $0x1e8] sm:$0xff]
      %v2118 = vld [vmem:[#allocation5 + $0x1f0] sm:$0xff]
      %v2119 = vld [vmem:[#allocation5 + $0x1f8] sm:$0xff]
      %v2184 = vunpack.c.l.b16 %v2056
      %v2185 = vunpack.c.h.b16 %v2056
      %v2186 = vunpack.c.l.b16 %v2057
      %v2187 = vunpack.c.h.b16 %v2057
      %v2188 = vunpack.c.l.b16 %v2058
      %v2189 = vunpack.c.h.b16 %v2058
      %v2190 = vunpack.c.l.b16 %v2059
      %v2191 = vunpack.c.h.b16 %v2059
      %v2192 = vunpack.c.l.b16 %v2060
      %v2193 = vunpack.c.h.b16 %v2060
      %v2194 = vunpack.c.l.b16 %v2061
      %v2195 = vunpack.c.h.b16 %v2061
      %v2196 = vunpack.c.l.b16 %v2062
      %v2197 = vunpack.c.h.b16 %v2062
      %v2198 = vunpack.c.l.b16 %v2063
      %v2199 = vunpack.c.h.b16 %v2063
      %v2200 = vunpack.c.l.b16 %v2064
      %v2201 = vunpack.c.h.b16 %v2064
      %v2202 = vunpack.c.l.b16 %v2065
      %v2203 = vunpack.c.h.b16 %v2065
      %v2204 = vunpack.c.l.b16 %v2066
      %v2205 = vunpack.c.h.b16 %v2066
      %v2206 = vunpack.c.l.b16 %v2067
      %v2207 = vunpack.c.h.b16 %v2067
      %v2208 = vunpack.c.l.b16 %v2068
      %v2209 = vunpack.c.h.b16 %v2068
      %v2210 = vunpack.c.l.b16 %v2069
      %v2211 = vunpack.c.h.b16 %v2069
      %v2212 = vunpack.c.l.b16 %v2070
      %v2213 = vunpack.c.h.b16 %v2070
      %v2214 = vunpack.c.l.b16 %v2071
      %v2215 = vunpack.c.h.b16 %v2071
      %v2216 = vunpack.c.l.b16 %v2072
      %v2217 = vunpack.c.h.b16 %v2072
      %v2218 = vunpack.c.l.b16 %v2073
      %v2219 = vunpack.c.h.b16 %v2073
      %v2220 = vunpack.c.l.b16 %v2074
      %v2221 = vunpack.c.h.b16 %v2074
      %v2222 = vunpack.c.l.b16 %v2075
      %v2223 = vunpack.c.h.b16 %v2075
      %v2224 = vunpack.c.l.b16 %v2076
      %v2225 = vunpack.c.h.b16 %v2076
      %v2226 = vunpack.c.l.b16 %v2077
      %v2227 = vunpack.c.h.b16 %v2077
      %v2228 = vunpack.c.l.b16 %v2078
      %v2229 = vunpack.c.h.b16 %v2078
      %v2230 = vunpack.c.l.b16 %v2079
      %v2231 = vunpack.c.h.b16 %v2079
      %v2232 = vunpack.c.l.b16 %v2080
      %v2233 = vunpack.c.h.b16 %v2080
      %v2234 = vunpack.c.l.b16 %v2081
      %v2235 = vunpack.c.h.b16 %v2081
      %v2236 = vunpack.c.l.b16 %v2082
      %v2237 = vunpack.c.h.b16 %v2082
      %v2238 = vunpack.c.l.b16 %v2083
      %v2239 = vunpack.c.h.b16 %v2083
      %v2240 = vunpack.c.l.b16 %v2084
      %v2241 = vunpack.c.h.b16 %v2084
      %v2242 = vunpack.c.l.b16 %v2085
      %v2243 = vunpack.c.h.b16 %v2085
      %v2244 = vunpack.c.l.b16 %v2086
      %v2245 = vunpack.c.h.b16 %v2086
      %v2246 = vunpack.c.l.b16 %v2087
      %v2247 = vunpack.c.h.b16 %v2087
      %v2248 = vunpack.c.l.b16 %v2088
      %v2249 = vunpack.c.h.b16 %v2088
      %v2250 = vunpack.c.l.b16 %v2089
      %v2251 = vunpack.c.h.b16 %v2089
      %v2252 = vunpack.c.l.b16 %v2090
      %v2253 = vunpack.c.h.b16 %v2090
      %v2254 = vunpack.c.l.b16 %v2091
      %v2255 = vunpack.c.h.b16 %v2091
      %v2256 = vunpack.c.l.b16 %v2092
      %v2257 = vunpack.c.h.b16 %v2092
      %v2258 = vunpack.c.l.b16 %v2093
      %v2259 = vunpack.c.h.b16 %v2093
      %v2260 = vunpack.c.l.b16 %v2094
      %v2261 = vunpack.c.h.b16 %v2094
      %v2262 = vunpack.c.l.b16 %v2095
      %v2263 = vunpack.c.h.b16 %v2095
      %v2264 = vunpack.c.l.b16 %v2096
      %v2265 = vunpack.c.h.b16 %v2096
      %v2266 = vunpack.c.l.b16 %v2097
      %v2267 = vunpack.c.h.b16 %v2097
      %v2268 = vunpack.c.l.b16 %v2098
      %v2269 = vunpack.c.h.b16 %v2098
      %v2270 = vunpack.c.l.b16 %v2099
      %v2271 = vunpack.c.h.b16 %v2099
      %v2272 = vunpack.c.l.b16 %v2100
      %v2273 = vunpack.c.h.b16 %v2100
      %v2274 = vunpack.c.l.b16 %v2101
      %v2275 = vunpack.c.h.b16 %v2101
      %v2276 = vunpack.c.l.b16 %v2102
      %v2277 = vunpack.c.h.b16 %v2102
      %v2278 = vunpack.c.l.b16 %v2103
      %v2279 = vunpack.c.h.b16 %v2103
      %v2280 = vunpack.c.l.b16 %v2104
      %v2281 = vunpack.c.h.b16 %v2104
      %v2282 = vunpack.c.l.b16 %v2105
      %v2283 = vunpack.c.h.b16 %v2105
      %v2284 = vunpack.c.l.b16 %v2106
      %v2285 = vunpack.c.h.b16 %v2106
      %v2286 = vunpack.c.l.b16 %v2107
      %v2287 = vunpack.c.h.b16 %v2107
      %v2288 = vunpack.c.l.b16 %v2108
      %v2289 = vunpack.c.h.b16 %v2108
      %v2290 = vunpack.c.l.b16 %v2109
      %v2291 = vunpack.c.h.b16 %v2109
      %v2292 = vunpack.c.l.b16 %v2110
      %v2293 = vunpack.c.h.b16 %v2110
      %v2294 = vunpack.c.l.b16 %v2111
      %v2295 = vunpack.c.h.b16 %v2111
      %v2296 = vunpack.c.l.b16 %v2112
      %v2297 = vunpack.c.h.b16 %v2112
      %v2298 = vunpack.c.l.b16 %v2113
      %v2299 = vunpack.c.h.b16 %v2113
      %v2300 = vunpack.c.l.b16 %v2114
      %v2301 = vunpack.c.h.b16 %v2114
      %v2302 = vunpack.c.l.b16 %v2115
      %v2303 = vunpack.c.h.b16 %v2115
      %v2304 = vunpack.c.l.b16 %v2116
      %v2305 = vunpack.c.h.b16 %v2116
      %v2306 = vunpack.c.l.b16 %v2117
      %v2307 = vunpack.c.h.b16 %v2117
      %v2308 = vunpack.c.l.b16 %v2118
      %v2309 = vunpack.c.h.b16 %v2118
      %v2310 = vunpack.c.l.b16 %v2119
      %v2311 = vunpack.c.h.b16 %v2119
      %v2312 = vpack.c.b16 %v2186, %v2184
      %v2313 = vpack.c.b16 %v2187, %v2185
      %v2314 = vpack.c.b16 %v2190, %v2188
      %v2315 = vpack.c.b16 %v2191, %v2189
      %v2316 = vpack.c.b16 %v2194, %v2192
      %v2317 = vpack.c.b16 %v2195, %v2193
      %v2318 = vpack.c.b16 %v2198, %v2196
      %v2319 = vpack.c.b16 %v2199, %v2197
      %v2320 = vpack.c.b16 %v2202, %v2200
      %v2321 = vpack.c.b16 %v2203, %v2201
      %v2322 = vpack.c.b16 %v2206, %v2204
      %v2323 = vpack.c.b16 %v2207, %v2205
      %v2324 = vpack.c.b16 %v2210, %v2208
      %v2325 = vpack.c.b16 %v2211, %v2209
      %v2326 = vpack.c.b16 %v2214, %v2212
      %v2327 = vpack.c.b16 %v2215, %v2213
      %v2328 = vpack.c.b16 %v2218, %v2216
      %v2329 = vpack.c.b16 %v2219, %v2217
      %v2330 = vpack.c.b16 %v2222, %v2220
      %v2331 = vpack.c.b16 %v2223, %v2221
      %v2332 = vpack.c.b16 %v2226, %v2224
      %v2333 = vpack.c.b16 %v2227, %v2225
      %v2334 = vpack.c.b16 %v2230, %v2228
      %v2335 = vpack.c.b16 %v2231, %v2229
      %v2336 = vpack.c.b16 %v2234, %v2232
      %v2337 = vpack.c.b16 %v2235, %v2233
      %v2338 = vpack.c.b16 %v2238, %v2236
      %v2339 = vpack.c.b16 %v2239, %v2237
      %v2340 = vpack.c.b16 %v2242, %v2240
      %v2341 = vpack.c.b16 %v2243, %v2241
      %v2342 = vpack.c.b16 %v2246, %v2244
      %v2343 = vpack.c.b16 %v2247, %v2245
      %v2344 = vpack.c.b16 %v2250, %v2248
      %v2345 = vpack.c.b16 %v2251, %v2249
      %v2346 = vpack.c.b16 %v2254, %v2252
      %v2347 = vpack.c.b16 %v2255, %v2253
      %v2348 = vpack.c.b16 %v2258, %v2256
      %v2349 = vpack.c.b16 %v2259, %v2257
      %v2350 = vpack.c.b16 %v2262, %v2260
      %v2351 = vpack.c.b16 %v2263, %v2261
      %v2352 = vpack.c.b16 %v2266, %v2264
      %v2353 = vpack.c.b16 %v2267, %v2265
      %v2354 = vpack.c.b16 %v2270, %v2268
      %v2355 = vpack.c.b16 %v2271, %v2269
      %v2356 = vpack.c.b16 %v2274, %v2272
      %v2357 = vpack.c.b16 %v2275, %v2273
      %v2358 = vpack.c.b16 %v2278, %v2276
      %v2359 = vpack.c.b16 %v2279, %v2277
      %v2360 = vpack.c.b16 %v2282, %v2280
      %v2361 = vpack.c.b16 %v2283, %v2281
      %v2362 = vpack.c.b16 %v2286, %v2284
      %v2363 = vpack.c.b16 %v2287, %v2285
      %v2364 = vpack.c.b16 %v2290, %v2288
      %v2365 = vpack.c.b16 %v2291, %v2289
      %v2366 = vpack.c.b16 %v2294, %v2292
      %v2367 = vpack.c.b16 %v2295, %v2293
      %v2368 = vpack.c.b16 %v2298, %v2296
      %v2369 = vpack.c.b16 %v2299, %v2297
      %v2370 = vpack.c.b16 %v2302, %v2300
      %v2371 = vpack.c.b16 %v2303, %v2301
      %v2372 = vpack.c.b16 %v2306, %v2304
      %v2373 = vpack.c.b16 %v2307, %v2305
      %v2374 = vpack.c.b16 %v2310, %v2308
      %v2375 = vpack.c.b16 %v2311, %v2309
      %2440 = vmatprep.subr.bf16.mxu0 %v2327
      %2441 = vmatpush1.bf16.msra.mxu0 %v2326
      %2442 = vmatprep.subr.bf16.mxu0 %v2325
      %2443 = vmatpush1.bf16.msra.mxu0 %v2324
      %2444 = vmatprep.subr.bf16.mxu0 %v2323
      %2445 = vmatpush1.bf16.msra.mxu0 %v2322
      %2446 = vmatprep.subr.bf16.mxu0 %v2321
      %2447 = vmatpush1.bf16.msra.mxu0 %v2320
      %2448 = vmatprep.subr.bf16.mxu0 %v2319
      %2449 = vmatpush1.bf16.msra.mxu0 %v2318
      %2450 = vmatprep.subr.bf16.mxu0 %v2317
      %2451 = vmatpush1.bf16.msra.mxu0 %v2316
      %2452 = vmatprep.subr.bf16.mxu0 %v2315
      %2453 = vmatpush1.bf16.msra.mxu0 %v2314
      %2454 = vmatprep.subr.bf16.mxu0 %v2313
      %2455 = vmatpush1.bf16.msra.mxu0 %v2312
      %2456 = vmatprep.subr.bf16.mxu0 %v2343
      %2457 = vmatpush2.bf16.msra.mxu0 %v2342
      %2458 = vmatprep.subr.bf16.mxu0 %v2341
      %2459 = vmatpush2.bf16.msra.mxu0 %v2340
      %2460 = vmatprep.subr.bf16.mxu0 %v2339
      %2461 = vmatpush2.bf16.msra.mxu0 %v2338
      %2462 = vmatprep.subr.bf16.mxu0 %v2337
      %2463 = vmatpush2.bf16.msra.mxu0 %v2336
      %2464 = vmatprep.subr.bf16.mxu0 %v2335
      %2465 = vmatpush2.bf16.msra.mxu0 %v2334
      %2466 = vmatprep.subr.bf16.mxu0 %v2333
      %2467 = vmatpush2.bf16.msra.mxu0 %v2332
      %2468 = vmatprep.subr.bf16.mxu0 %v2331
      %2469 = vmatpush2.bf16.msra.mxu0 %v2330
      %2470 = vmatprep.subr.bf16.mxu0 %v2329
      %2471 = vmatpush2.bf16.msra.mxu0 %v2328
      %2472 = vmatprep.mubr.bf16.mxu0 %v2053
      %2473 = vmatmul.mubr.bf16.gmra.mxu0 %v2052
      %v2474 = vpop.f32.mrf.mxu0
      %v2475 = vadd.f32 0.0, %v2474
      %v2476 = vpop.f32.mrf.mxu0
      %v2477 = vadd.f32 0.0, %v2476
      %v2478 = vpop.f32.mrf.mxu0
      %v2479 = vadd.f32 0.0, %v2478
      %v2480 = vpop.f32.mrf.mxu0
      %v2481 = vadd.f32 0.0, %v2480
      %2482 = vdwg.mxu0
      %2483 = vmatprep.subr.bf16.mxu0 %v2359
      %2484 = vmatpush1.bf16.msra.mxu0 %v2358
      %2485 = vmatprep.subr.bf16.mxu0 %v2357
      %2486 = vmatpush1.bf16.msra.mxu0 %v2356
      %2487 = vmatprep.subr.bf16.mxu0 %v2355
      %2488 = vmatpush1.bf16.msra.mxu0 %v2354
      %2489 = vmatprep.subr.bf16.mxu0 %v2353
      %2490 = vmatpush1.bf16.msra.mxu0 %v2352
      %2491 = vmatprep.subr.bf16.mxu0 %v2351
      %2492 = vmatpush1.bf16.msra.mxu0 %v2350
      %2493 = vmatprep.subr.bf16.mxu0 %v2349
      %2494 = vmatpush1.bf16.msra.mxu0 %v2348
      %2495 = vmatprep.subr.bf16.mxu0 %v2347
      %2496 = vmatpush1.bf16.msra.mxu0 %v2346
      %2497 = vmatprep.subr.bf16.mxu0 %v2345
      %2498 = vmatpush1.bf16.msra.mxu0 %v2344
      %2499 = vmatprep.subr.bf16.mxu0 %v2375
      %2500 = vmatpush2.bf16.msra.mxu0 %v2374
      %2501 = vmatprep.subr.bf16.mxu0 %v2373
      %2502 = vmatpush2.bf16.msra.mxu0 %v2372
      %2503 = vmatprep.subr.bf16.mxu0 %v2371
      %2504 = vmatpush2.bf16.msra.mxu0 %v2370
      %2505 = vmatprep.subr.bf16.mxu0 %v2369
      %2506 = vmatpush2.bf16.msra.mxu0 %v2368
      %2507 = vmatprep.subr.bf16.mxu0 %v2367
      %2508 = vmatpush2.bf16.msra.mxu0 %v2366
      %2509 = vmatprep.subr.bf16.mxu0 %v2365
      %2510 = vmatpush2.bf16.msra.mxu0 %v2364
      %2511 = vmatprep.subr.bf16.mxu0 %v2363
      %2512 = vmatpush2.bf16.msra.mxu0 %v2362
      %2513 = vmatprep.subr.bf16.mxu0 %v2361
      %2514 = vmatpush2.bf16.msra.mxu0 %v2360
      %2515 = vmatprep.mubr.bf16.mxu0 %v2055
      %2516 = vmatmul.mubr.bf16.gmra.mxu0 %v2054
      %v2517 = vpop.f32.mrf.mxu0
      %v2518 = vadd.f32 %v2475, %v2517
      %v2519 = vpop.f32.mrf.mxu0
      %v2520 = vadd.f32 %v2477, %v2519
      %v2521 = vpop.f32.mrf.mxu0
      %v2522 = vadd.f32 %v2479, %v2521
      %v2523 = vpop.f32.mrf.mxu0
      %v2524 = vadd.f32 %v2481, %v2523
      %2525 = vdwg.mxu0
      %2526 = vst [vmem:[%s3] sm:$0xff] %v2518
      %2527 = vst [vmem:[%s3 + $0x8] sm:$0xff] %v2520
      %2528 = vst [vmem:[%s3 + $0x10] sm:$0xff] %v2522
      %2529 = vst [vmem:[%s3 + $0x18] sm:$0xff] %v2524
    $region29: #{forward.1} parent=1 // pred_fallthru
      _
    // Predicated region
    $region30: #{forward.1} parent=1 // pred_check
      _
    $region31: #{forward.1} parent=1 // pred_check_branch
      %2531 = sbr.rel (0) target = $region33
    $region32: #{forward.1} parent=1 // pred_region
      _
    $region33: #{forward.1} parent=1 // pred_fallthru
      _
    // Predicated region
    $region34: #{forward.1} parent=1 // pred_check
      _
    $region35: #{forward.1} parent=1 // pred_check_branch
      %2533 = sbr.rel (0) target = $region37
    $region36: #{forward.1} parent=1 // pred_region
      _
    $region37: #{forward.1} parent=1 // pred_fallthru
      _
    %2534 = vsyncpa [#allocation4], 1
    %2535 = vsyncpa [#allocation6], 1

</llo_original>
